<compile_context>
chip_gen: v7x
topology: tpu7x:2x2x1
jax: 0.10.0
libtpu: 0.0.40
codegen_flags: <defaults>
</compile_context>

<pallas_src>
import jax
import jax.numpy as jnp
from jax import lax
from jax.experimental import pallas as pl
from jax.experimental.pallas import tpu as pltpu

IN_DIM, H1, H2, OUT_DIM = 5, 24, 24, 3
IN_PAD = 8           # features padded 5 -> 8 sublanes; row 7 carries a constant 1.0
HA = 32              # hidden width padded 24 -> 32; row 24 carries the 1.0 through ReLU
TB = 2048            # batch tile (lanes) per grid step
CHUNK = 512          # inner sub-chunk width (caps live vregs per chunk)
N_CHUNKS = TB // CHUNK
SMALL_BATCH_CUTOFF = 1024   # below this, the fused XLA MLP beats any standalone kernel


def dqn_mlp_kernel(x_ref, w1_ref, w2_ref, w3_ref, o_ref):
    """One batch tile.

    x_ref : [IN_PAD, TB]   feature-major; row IN_PAD-1 == 1.0 (bias input)
    w1_ref: [HA, IN_PAD]   [w1 | b1] + ones-carry row (biases folded in)
    w2_ref: [HA, HA]
    w3_ref: [OUT_DIM, HA]
    o_ref : [OUT_DIM, TB]  lane-dense output
    """
    w1 = w1_ref[...]
    w2 = w2_ref[...]
    w3 = w3_ref[...]

    def chunk(c, carry):
        base = pl.multiple_of(c * CHUNK, CHUNK)
        x = x_ref[:, pl.ds(base, CHUNK)]                                     # [8,  C]
        h1 = jnp.maximum(jnp.dot(w1, x, preferred_element_type=jnp.float32), 0.0)
        h2 = jnp.maximum(jnp.dot(w2, h1, preferred_element_type=jnp.float32), 0.0)
        o_ref[:, pl.ds(base, CHUNK)] = jnp.dot(
            w3, h2, preferred_element_type=jnp.float32).astype(o_ref.dtype)  # [3,  C]
        return carry

    lax.fori_loop(0, N_CHUNKS, chunk, 0, unroll=True)


def _fold_params(params):
    """Fold PyTorch-layout params (w:[out,in], b:[out]) into bias-augmented,
    sublane-padded weight matrices (ones-row trick)."""
    w1, b1, w2, b2, w3, b3 = params
    W1a = jnp.zeros((HA, IN_PAD), jnp.float32)
    W1a = W1a.at[:H1, :IN_DIM].set(w1)
    W1a = W1a.at[:H1, IN_PAD - 1].set(b1)      # bias column multiplies the ones row of x
    W1a = W1a.at[H1, IN_PAD - 1].set(1.0)      # h1[H1] = ReLU(1) = 1

    W2a = jnp.zeros((HA, HA), jnp.float32)
    W2a = W2a.at[:H2, :H1].set(w2)
    W2a = W2a.at[:H2, H1].set(b2)              # bias column multiplies h1[H1] == 1
    W2a = W2a.at[H2, H1].set(1.0)              # h2[H2] = ReLU(1) = 1

    W3a = jnp.zeros((OUT_DIM, HA), jnp.float32)
    W3a = W3a.at[:, :H2].set(w3)
    W3a = W3a.at[:, H2].set(b3)                # bias column multiplies h2[H2] == 1
    return W1a, W2a, W3a


def reference_forward(x, params):
    """Plain XLA MLP (also the small-batch fast path)."""
    w1, b1, w2, b2, w3, b3 = params
    h1 = jnp.maximum(x @ w1.T + b1, 0.0)
    h2 = jnp.maximum(h1 @ w2.T + b2, 0.0)
    return h2 @ w3.T + b3


def dqn_forward(x, params, use_pallas=None):
    """x: [B, 5] float -> logits [B, 3] float32 (PyTorch nn.Linear semantics)."""
    B = x.shape[0]
    if use_pallas is None:
        use_pallas = B >= SMALL_BATCH_CUTOFF
    if not use_pallas:
        return reference_forward(x.astype(jnp.float32), params)

    W1a, W2a, W3a = _fold_params(params)
    n_tiles = pl.cdiv(B, TB)
    B_pad = n_tiles * TB

    # Feature-major [IN_PAD, B_pad]: batch on the 128-lane axis, features on
    # sublanes. Rows 0..4 = features, rows 5..6 = zero pad, row 7 = 1.0 (bias).
    x32 = x.astype(jnp.float32)
    x_aug = jnp.concatenate(
        [x32,
         jnp.zeros((B, IN_PAD - IN_DIM - 1), jnp.float32),
         jnp.ones((B, 1), jnp.float32)], axis=1)                         # [B, 8]
    x_t = jnp.pad(x_aug, ((0, B_pad - B), (0, 0))).T                     # [8, B_pad]

    out_t = pl.pallas_call(
        dqn_mlp_kernel,
        out_shape=jax.ShapeDtypeStruct((OUT_DIM, B_pad), jnp.float32),
        grid=(n_tiles,),
        in_specs=[
            pl.BlockSpec((IN_PAD, TB), lambda i: (0, i)),     # batch-tiled input
            pl.BlockSpec((HA, IN_PAD), lambda i: (0, 0)),     # weights: fetched once,
            pl.BlockSpec((HA, HA),     lambda i: (0, 0)),     # resident across grid
            pl.BlockSpec((OUT_DIM, HA), lambda i: (0, 0)),
        ],
        out_specs=pl.BlockSpec((OUT_DIM, TB), lambda i: (0, i)),  # lane-dense store
        compiler_params=pltpu.CompilerParams(
            # Megacore hint; on v7x evaluate CORE_PARALLEL / pl.core_map with xprof.
            dimension_semantics=("parallel",),
            # Let XLA fuse the pad+transpose producing operand 0 into the Pallas
            # operand instead of materializing a transposed HBM copy of x.
            allow_input_fusion=[True, False, False, False],
        ),
    )(x_t, W1a, W2a, W3a)

    return out_t[:, :B].T                                                # [B, 3]


def init_params(key):
    """PyTorch nn.Linear default init: U(-1/sqrt(fan_in), +1/sqrt(fan_in))."""
    ks = jax.random.split(key, 6)

    def linear(kw, kb, fan_in, fan_out):
        bound = 1.0 / jnp.sqrt(jnp.float32(fan_in))
        w = jax.random.uniform(kw, (fan_out, fan_in), jnp.float32, -bound, bound)
        b = jax.random.uniform(kb, (fan_out,), jnp.float32, -bound, bound)
        return w, b

    w1, b1 = linear(ks[0], ks[1], IN_DIM, H1)
    w2, b2 = linear(ks[2], ks[3], H1, H2)
    w3, b3 = linear(ks[4], ks[5], H2, OUT_DIM)
    return (w1, b1, w2, b2, w3, b3)


if __name__ == "__main__":
    key = jax.random.PRNGKey(0)
    k1, k2, kp = jax.random.split(key, 3)
    params = init_params(kp)

    fwd = jax.jit(dqn_forward, static_argnames=("use_pallas",))

    # Small demo batch, forced through the Pallas kernel (single grid tile).
    x_small = jax.random.normal(k1, (8, IN_DIM), jnp.float32)
    out_small = jax.block_until_ready(fwd(x_small, params, use_pallas=True))
    ref_small = reference_forward(x_small, params)
    assert out_small.shape == (8, OUT_DIM)
    assert jnp.allclose(out_small, ref_small, atol=1e-5, rtol=1e-5)

    # Larger batch exercising multiple grid tiles + padding remainder
    # (auto-dispatch picks the Pallas path since B >= SMALL_BATCH_CUTOFF).
    x_big = jax.random.normal(k2, (2304, IN_DIM), jnp.float32)
    out_big = jax.block_until_ready(fwd(x_big, params))
    ref_big = reference_forward(x_big, params)
    assert out_big.shape == (2304, OUT_DIM)
    assert jnp.allclose(out_big, ref_big, atol=1e-5, rtol=1e-5)

    print("KERNEL_OK")
</pallas_src>

<mosaic_0001>
module attributes {stable_mosaic.version = 11 : i64} {
  func.func @dqn_mlp_kernel(%arg0: i32, %arg1: memref<8x2048xf32, #tpu.memory_space<vmem>>, %arg2: memref<32x8xf32, #tpu.memory_space<vmem>>, %arg3: memref<32x32xf32, #tpu.memory_space<vmem>>, %arg4: memref<3x32xf32, #tpu.memory_space<vmem>>, %arg5: memref<3x2048xf32, #tpu.memory_space<vmem>>) attributes {dimension_semantics = [#tpu.dimension_semantics<parallel>], iteration_bounds = array<i64: 1>, scalar_prefetch = 0 : i64, scratch_operands = 0 : i64, tpu.core_type = #tpu.core_type<tc>, window_params = [{transform_indices = @transform_0, window_bounds = array<i64: 8, 2048>}, {pipeline_mode = #tpu.pipeline_mode<synchronous>, transform_indices = @transform_1, window_bounds = array<i64: 32, 8>}, {pipeline_mode = #tpu.pipeline_mode<synchronous>, transform_indices = @transform_2, window_bounds = array<i64: 32, 32>}, {pipeline_mode = #tpu.pipeline_mode<synchronous>, transform_indices = @transform_3, window_bounds = array<i64: 3, 32>}, {transform_indices = @transform_4, window_bounds = array<i64: 3, 2048>}]} {
    %c0 = arith.constant 0 : index
    %c0_0 = arith.constant 0 : index
    %0 = vector.load %arg2[%c0, %c0_0] : memref<32x8xf32, #tpu.memory_space<vmem>>, vector<32x8xf32>
    %c0_1 = arith.constant 0 : index
    %c0_2 = arith.constant 0 : index
    %1 = vector.load %arg3[%c0_1, %c0_2] : memref<32x32xf32, #tpu.memory_space<vmem>>, vector<32x32xf32>
    %c0_3 = arith.constant 0 : index
    %c0_4 = arith.constant 0 : index
    %2 = vector.load %arg4[%c0_3, %c0_4] : memref<3x32xf32, #tpu.memory_space<vmem>>, vector<3x32xf32>
    %c0_i32 = arith.constant 0 : i32
    %c512_i32 = arith.constant 512 : i32
    %3 = arith.muli %c0_i32, %c512_i32 : i32
    %4 = tpu.assume_multiple %3, 512 : i32
    %c0_5 = arith.constant 0 : index
    %5 = arith.index_cast %4 : i32 to index
    %6 = vector.load %arg1[%c0_5, %5] : memref<8x2048xf32, #tpu.memory_space<vmem>>, vector<8x512xf32>
    %cst = arith.constant dense<0.000000e+00> : vector<32x512xf32>
    %7 = tpu.matmul %0, %6, %cst {dimension_numbers = #tpu.dot_dimension_numbers<[1], [0], [0], [1], [0, 0, 1, 1], [], []>} : vector<32x8xf32>, vector<8x512xf32>, vector<32x512xf32> -> vector<32x512xf32>
    %cst_6 = arith.constant 0.000000e+00 : f32
    %8 = vector.broadcast %cst_6 : f32 to vector<32x512xf32>
    %9 = arith.maximumf %7, %8 : vector<32x512xf32>
    %cst_7 = arith.constant dense<0.000000e+00> : vector<32x512xf32>
    %10 = tpu.matmul %1, %9, %cst_7 {dimension_numbers = #tpu.dot_dimension_numbers<[1], [0], [0], [1], [0, 0, 1, 1], [], []>} : vector<32x32xf32>, vector<32x512xf32>, vector<32x512xf32> -> vector<32x512xf32>
    %cst_8 = arith.constant 0.000000e+00 : f32
    %11 = vector.broadcast %cst_8 : f32 to vector<32x512xf32>
    %12 = arith.maximumf %10, %11 : vector<32x512xf32>
    %cst_9 = arith.constant dense<0.000000e+00> : vector<3x512xf32>
    %13 = tpu.matmul %2, %12, %cst_9 {dimension_numbers = #tpu.dot_dimension_numbers<[1], [0], [0], [1], [0, 0, 1, 1], [], []>} : vector<3x32xf32>, vector<32x512xf32>, vector<3x512xf32> -> vector<3x512xf32>
    %c0_10 = arith.constant 0 : index
    %14 = arith.index_cast %4 : i32 to index
    %15 = vector.load %arg5[%c0_10, %14] : memref<3x2048xf32, #tpu.memory_space<vmem>>, vector<3x512xf32>
    tpu.vector_store %arg5[%c0_10, %14], %13 {strides = array<i32>} : memref<3x2048xf32, #tpu.memory_space<vmem>>, vector<3x512xf32>,
    %c1_i32 = arith.constant 1 : i32
    %c512_i32_11 = arith.constant 512 : i32
    %16 = arith.muli %c1_i32, %c512_i32_11 : i32
    %17 = tpu.assume_multiple %16, 512 : i32
    %c0_12 = arith.constant 0 : index
    %18 = arith.index_cast %17 : i32 to index
    %19 = vector.load %arg1[%c0_12, %18] : memref<8x2048xf32, #tpu.memory_space<vmem>>, vector<8x512xf32>
    %cst_13 = arith.constant dense<0.000000e+00> : vector<32x512xf32>
    %20 = tpu.matmul %0, %19, %cst_13 {dimension_numbers = #tpu.dot_dimension_numbers<[1], [0], [0], [1], [0, 0, 1, 1], [], []>} : vector<32x8xf32>, vector<8x512xf32>, vector<32x512xf32> -> vector<32x512xf32>
    %cst_14 = arith.constant 0.000000e+00 : f32
    %21 = vector.broadcast %cst_14 : f32 to vector<32x512xf32>
    %22 = arith.maximumf %20, %21 : vector<32x512xf32>
    %cst_15 = arith.constant dense<0.000000e+00> : vector<32x512xf32>
    %23 = tpu.matmul %1, %22, %cst_15 {dimension_numbers = #tpu.dot_dimension_numbers<[1], [0], [0], [1], [0, 0, 1, 1], [], []>} : vector<32x32xf32>, vector<32x512xf32>, vector<32x512xf32> -> vector<32x512xf32>
    %cst_16 = arith.constant 0.000000e+00 : f32
    %24 = vector.broadcast %cst_16 : f32 to vector<32x512xf32>
    %25 = arith.maximumf %23, %24 : vector<32x512xf32>
    %cst_17 = arith.constant dense<0.000000e+00> : vector<3x512xf32>
    %26 = tpu.matmul %2, %25, %cst_17 {dimension_numbers = #tpu.dot_dimension_numbers<[1], [0], [0], [1], [0, 0, 1, 1], [], []>} : vector<3x32xf32>, vector<32x512xf32>, vector<3x512xf32> -> vector<3x512xf32>
    %c0_18 = arith.constant 0 : index
    %27 = arith.index_cast %17 : i32 to index
    %28 = vector.load %arg5[%c0_18, %27] : memref<3x2048xf32, #tpu.memory_space<vmem>>, vector<3x512xf32>
    tpu.vector_store %arg5[%c0_18, %27], %26 {strides = array<i32>} : memref<3x2048xf32, #tpu.memory_space<vmem>>, vector<3x512xf32>,
    %c2_i32 = arith.constant 2 : i32
    %c512_i32_19 = arith.constant 512 : i32
    %29 = arith.muli %c2_i32, %c512_i32_19 : i32
    %30 = tpu.assume_multiple %29, 512 : i32
    %c0_20 = arith.constant 0 : index
    %31 = arith.index_cast %30 : i32 to index
    %32 = vector.load %arg1[%c0_20, %31] : memref<8x2048xf32, #tpu.memory_space<vmem>>, vector<8x512xf32>
    %cst_21 = arith.constant dense<0.000000e+00> : vector<32x512xf32>
    %33 = tpu.matmul %0, %32, %cst_21 {dimension_numbers = #tpu.dot_dimension_numbers<[1], [0], [0], [1], [0, 0, 1, 1], [], []>} : vector<32x8xf32>, vector<8x512xf32>, vector<32x512xf32> -> vector<32x512xf32>
    %cst_22 = arith.constant 0.000000e+00 : f32
    %34 = vector.broadcast %cst_22 : f32 to vector<32x512xf32>
    %35 = arith.maximumf %33, %34 : vector<32x512xf32>
    %cst_23 = arith.constant dense<0.000000e+00> : vector<32x512xf32>
    %36 = tpu.matmul %1, %35, %cst_23 {dimension_numbers = #tpu.dot_dimension_numbers<[1], [0], [0], [1], [0, 0, 1, 1], [], []>} : vector<32x32xf32>, vector<32x512xf32>, vector<32x512xf32> -> vector<32x512xf32>
    %cst_24 = arith.constant 0.000000e+00 : f32
    %37 = vector.broadcast %cst_24 : f32 to vector<32x512xf32>
    %38 = arith.maximumf %36, %37 : vector<32x512xf32>
    %cst_25 = arith.constant dense<0.000000e+00> : vector<3x512xf32>
    %39 = tpu.matmul %2, %38, %cst_25 {dimension_numbers = #tpu.dot_dimension_numbers<[1], [0], [0], [1], [0, 0, 1, 1], [], []>} : vector<3x32xf32>, vector<32x512xf32>, vector<3x512xf32> -> vector<3x512xf32>
    %c0_26 = arith.constant 0 : index
    %40 = arith.index_cast %30 : i32 to index
    %41 = vector.load %arg5[%c0_26, %40] : memref<3x2048xf32, #tpu.memory_space<vmem>>, vector<3x512xf32>
    tpu.vector_store %arg5[%c0_26, %40], %39 {strides = array<i32>} : memref<3x2048xf32, #tpu.memory_space<vmem>>, vector<3x512xf32>,
    %c3_i32 = arith.constant 3 : i32
    %c512_i32_27 = arith.constant 512 : i32
    %42 = arith.muli %c3_i32, %c512_i32_27 : i32
    %43 = tpu.assume_multiple %42, 512 : i32
    %c0_28 = arith.constant 0 : index
    %44 = arith.index_cast %43 : i32 to index
    %45 = vector.load %arg1[%c0_28, %44] : memref<8x2048xf32, #tpu.memory_space<vmem>>, vector<8x512xf32>
    %cst_29 = arith.constant dense<0.000000e+00> : vector<32x512xf32>
    %46 = tpu.matmul %0, %45, %cst_29 {dimension_numbers = #tpu.dot_dimension_numbers<[1], [0], [0], [1], [0, 0, 1, 1], [], []>} : vector<32x8xf32>, vector<8x512xf32>, vector<32x512xf32> -> vector<32x512xf32>
    %cst_30 = arith.constant 0.000000e+00 : f32
    %47 = vector.broadcast %cst_30 : f32 to vector<32x512xf32>
    %48 = arith.maximumf %46, %47 : vector<32x512xf32>
    %cst_31 = arith.constant dense<0.000000e+00> : vector<32x512xf32>
    %49 = tpu.matmul %1, %48, %cst_31 {dimension_numbers = #tpu.dot_dimension_numbers<[1], [0], [0], [1], [0, 0, 1, 1], [], []>} : vector<32x32xf32>, vector<32x512xf32>, vector<32x512xf32> -> vector<32x512xf32>
    %cst_32 = arith.constant 0.000000e+00 : f32
    %50 = vector.broadcast %cst_32 : f32 to vector<32x512xf32>
    %51 = arith.maximumf %49, %50 : vector<32x512xf32>
    %cst_33 = arith.constant dense<0.000000e+00> : vector<3x512xf32>
    %52 = tpu.matmul %2, %51, %cst_33 {dimension_numbers = #tpu.dot_dimension_numbers<[1], [0], [0], [1], [0, 0, 1, 1], [], []>} : vector<3x32xf32>, vector<32x512xf32>, vector<3x512xf32> -> vector<3x512xf32>
    %c0_34 = arith.constant 0 : index
    %53 = arith.index_cast %43 : i32 to index
    %54 = vector.load %arg5[%c0_34, %53] : memref<3x2048xf32, #tpu.memory_space<vmem>>, vector<3x512xf32>
    tpu.vector_store %arg5[%c0_34, %53], %52 {strides = array<i32>} : memref<3x2048xf32, #tpu.memory_space<vmem>>, vector<3x512xf32>,
    %c4_i32 = arith.constant 4 : i32
    return
  }
  func.func @transform_0(%arg0: i32) -> (i32, i32) {
    %c0_i32 = arith.constant 0 : i32
    %c0_i32_0 = arith.constant 0 : i32
    return %c0_i32, %arg0 : i32, i32
  }
  func.func @transform_1(%arg0: i32) -> (i32, i32) {
    %c0_i32 = arith.constant 0 : i32
    %c0_i32_0 = arith.constant 0 : i32
    %c0_i32_1 = arith.constant 0 : i32
    return %c0_i32, %c0_i32_0 : i32, i32
  }
  func.func @transform_2(%arg0: i32) -> (i32, i32) {
    %c0_i32 = arith.constant 0 : i32
    %c0_i32_0 = arith.constant 0 : i32
    %c0_i32_1 = arith.constant 0 : i32
    return %c0_i32, %c0_i32_0 : i32, i32
  }
  func.func @transform_3(%arg0: i32) -> (i32, i32) {
    %c0_i32 = arith.constant 0 : i32
    %c0_i32_0 = arith.constant 0 : i32
    %c0_i32_1 = arith.constant 0 : i32
    return %c0_i32, %c0_i32_0 : i32, i32
  }
  func.func @transform_4(%arg0: i32) -> (i32, i32) {
    %c0_i32 = arith.constant 0 : i32
    %c0_i32_0 = arith.constant 0 : i32
    return %c0_i32, %arg0 : i32, i32
  }
}

</mosaic_0001>

<llo_original>
// kernel: dqn_forward.2
$region0: #{dqn_forward.2}
  #allocation0 [shape = 'u32[]', space=smem, size = 0x4, offset = 0x4, fixed_abs, tag = 'smem constant byte address 0x4 - core index']
  #allocation1 [shape = 'u32[144,128]{1,0:T(1,128)}', space=vmem, size = 0x12000, scoped, tag = 'internal scratch']
  #allocation2 [shape = 'u32[2048]{0}', space=vmem, size = 0x2000, scoped, tag = 'scoped memory for dqn_forward.2']
  #allocation3 [shape = 'u32[2048]{0}', space=vmem, size = 0x2000, scoped, tag = 'scoped memory for dqn_forward.2']
  #allocation4 [shape = 'u32[2048]{0}', space=vmem, size = 0x2000, scoped, tag = 'scoped memory for dqn_forward.2']
  #allocation5 [shape = 'u32[2048]{0}', space=vmem, size = 0x2000, scoped, tag = 'scoped memory for dqn_forward.2']
  #allocation6 [shape = 'u32[2048]{0}', space=vmem, size = 0x2000, scoped, tag = 'scoped memory for dqn_forward.2']
  %s0 = inlined_call_operand.vmem [shape: f32[32,8], index: 0, kind: input, shape index: {}]
  %s1 = inlined_call_operand.vmem [shape: f32[32,32], index: 1, kind: input, shape index: {}]
  %s2 = inlined_call_operand.vmem [shape: f32[3,32], index: 2, kind: input, shape index: {}]
  %s3 = inlined_call_operand.vmem [shape: f32[8,8], index: 3, kind: input, shape index: {}]
  %s4 = inlined_call_operand.<no memory space> [shape: f32[], index: 4, kind: input, shape index: {}]
  %s5 = inlined_call_operand.vmem [shape: f32[3,2048], index: 5, kind: output, shape index: {}]
  %s6 = sld [smem:[#allocation0]]
  $region26: #{dqn_forward.2} parent=0
    _
  %s8 = ssub.s32 1, %s6
  %s9 = scalar_select 0, %s8, %s6
  %v10 = vstv %s4
  $region1: #{dqn_forward.2} parent=0
    #allocation7 [shape = 'u8[65536]{0}', space=vmem, size = 0x10000, dematerialized = true, scoped, tag = 'FusionAdapter Buffer %fusion.1 = f32[8,2048]{1,0:T(8,128)} fusion(%param_3.2, %param_4), kind=kLoop, calls=%fused_computation.1.clone, metadata={op_name="jit(dqn_forward)/transpose" stack_frame_id=21}']
    // Predicated region
    $region2: #{dqn_forward.2} parent=1 // pred_check
      _
    $region3: #{dqn_forward.2} parent=1 // pred_check_branch
      %12 = sbr.rel (0) target = $region5
    $region4: #{dqn_forward.2} parent=1 // pred_region
      _
    $region5: #{dqn_forward.2} parent=1 // pred_fallthru
      _
    // Predicated region
    $region6: #{dqn_forward.2} parent=1 // pred_check
      _
    $region7: #{dqn_forward.2} parent=1 // pred_check_branch
      %14 = sbr.rel (0) target = $region9
    $region8: #{dqn_forward.2} parent=1 // pred_region
      _
    $region9: #{dqn_forward.2} parent=1 // pred_fallthru
      _
    // Predicated region
    $region10: #{dqn_forward.2} parent=1 // pred_check
      _
    $region11: #{dqn_forward.2} parent=1 // pred_check_branch
      %16 = sbr.rel (0) target = $region13
    $region12: #{dqn_forward.2} parent=1 // pred_region
      _
    $region13: #{dqn_forward.2} parent=1 // pred_fallthru
      _
    // Predicated region
    $region14: #{dqn_forward.2} parent=1 // pred_check
      _
    $region15: #{dqn_forward.2} parent=1 // pred_check_branch
      %18 = sbr.rel (0) target = $region17
    $region16: #{dqn_forward.2} parent=1 // pred_region
      _
    $region17: #{dqn_forward.2} parent=1 // pred_fallthru
      _
    %v19 = vld [vmem:[%s3] sm:$0xff]
    %v20 = vlaneseq
    %v21 = vand.u32 %v20, 127
    %vm23 = vcmp.lt.s32.totalorder %v21, 8
    %v24 = vsel %vm23, %v19, %v10
    %26 = vst [vmem:[#allocation7] sm:$0xff] %v24
    %s27 = scalar_lea.vmem [#allocation7], 8
    %29 = vst [vmem:[%s27] sm:$0xff] %v10
    %s30 = scalar_lea.vmem [#allocation7], 16
    %32 = vst [vmem:[%s30] sm:$0xff] %v10
    %s33 = scalar_lea.vmem [#allocation7], 24
    %35 = vst [vmem:[%s33] sm:$0xff] %v10
    %s36 = scalar_lea.vmem [#allocation7], 32
    %38 = vst [vmem:[%s36] sm:$0xff] %v10
    %s39 = scalar_lea.vmem [#allocation7], 40
    %41 = vst [vmem:[%s39] sm:$0xff] %v10
    %s42 = scalar_lea.vmem [#allocation7], 48
    %44 = vst [vmem:[%s42] sm:$0xff] %v10
    %s45 = scalar_lea.vmem [#allocation7], 56
    %47 = vst [vmem:[%s45] sm:$0xff] %v10
    %s48 = scalar_lea.vmem [#allocation7], 64
    %50 = vst [vmem:[%s48] sm:$0xff] %v10
    %s51 = scalar_lea.vmem [#allocation7], 72
    %53 = vst [vmem:[%s51] sm:$0xff] %v10
    %s54 = scalar_lea.vmem [#allocation7], 80
    %56 = vst [vmem:[%s54] sm:$0xff] %v10
    %s57 = scalar_lea.vmem [#allocation7], 88
    %59 = vst [vmem:[%s57] sm:$0xff] %v10
    %s60 = scalar_lea.vmem [#allocation7], 96
    %62 = vst [vmem:[%s60] sm:$0xff] %v10
    %s63 = scalar_lea.vmem [#allocation7], 104
    %65 = vst [vmem:[%s63] sm:$0xff] %v10
    %s66 = scalar_lea.vmem [#allocation7], 112
    %68 = vst [vmem:[%s66] sm:$0xff] %v10
    %s69 = scalar_lea.vmem [#allocation7], 120
    %71 = vst [vmem:[%s69] sm:$0xff] %v10
    %v72 = vld [vmem:[%s0] sm:$0xff]
    %v73 = vld [vmem:[%s0 + $0x8] sm:$0xff]
    %v74 = vld [vmem:[%s0 + $0x10] sm:$0xff]
    %v75 = vld [vmem:[%s0 + $0x18] sm:$0xff]
    %v76 = vld [vmem:[%s1] sm:$0xff]
    %v77 = vld [vmem:[%s1 + $0x8] sm:$0xff]
    %v78 = vld [vmem:[%s1 + $0x10] sm:$0xff]
    %v79 = vld [vmem:[%s1 + $0x18] sm:$0xff]
    %v80 = vld [vmem:[%s2] sm:$0x7]
    %v81 = vld [vmem:[#allocation7] sm:$0xff]
    %v82 = vld [vmem:[#allocation7 + $0x8] sm:$0xff]
    %v83 = vld [vmem:[#allocation7 + $0x10] sm:$0xff]
    %v84 = vld [vmem:[#allocation7 + $0x18] sm:$0xff]
    %vm85 = vcmask 64512
    %v87 = vsel %vm85, %v72, 0
    %v90 = vsel %vm85, %v73, 0
    %v93 = vsel %vm85, %v74, 0
    %v96 = vsel %vm85, %v75, 0
    %98 = vmatprep.subr.mxu0 %v82
    %99 = vmatpush1.msra.mxu0 %v81
    %100 = vmatprep.subr.mxu0 0.0
    %101 = vmatpush1.msra.mxu0 0.0
    %102 = vmatprep.subr.mxu0 0.0
    %103 = vmatpush1.msra.mxu0 0.0
    %104 = vmatprep.subr.mxu0 0.0
    %105 = vmatpush1.msra.mxu0 0.0
    %106 = vmatprep.subr.mxu0 0.0
    %107 = vmatpush1.msra.mxu0 0.0
    %108 = vmatprep.subr.mxu0 0.0
    %109 = vmatpush1.msra.mxu0 0.0
    %110 = vmatprep.subr.mxu0 0.0
    %111 = vmatpush1.msra.mxu0 0.0
    %112 = vmatprep.subr.mxu0 0.0
    %113 = vmatpush1.msra.mxu0 0.0
    %114 = vmatprep.subr.mxu0 0.0
    %115 = vmatpush1.msra.mxu0 0.0
    %116 = vmatprep.subr.mxu0 0.0
    %117 = vmatpush1.msra.mxu0 0.0
    %118 = vmatprep.subr.mxu0 0.0
    %119 = vmatpush1.msra.mxu0 0.0
    %120 = vmatprep.subr.mxu0 0.0
    %121 = vmatpush1.msra.mxu0 0.0
    %122 = vmatprep.subr.mxu0 0.0
    %123 = vmatpush1.msra.mxu0 0.0
    %124 = vmatprep.subr.mxu0 0.0
    %125 = vmatpush1.msra.mxu0 0.0
    %126 = vmatprep.subr.mxu0 0.0
    %127 = vmatpush1.msra.mxu0 0.0
    %128 = vmatprep.subr.mxu0 0.0
    %129 = vmatpush1.msra.mxu0 0.0
    %130 = vmatprep.subr.mxu0 0.0
    %131 = vmatpush1.msra.mxu0 0.0
    %132 = vmatprep.subr.mxu0 0.0
    %133 = vmatpush1.msra.mxu0 0.0
    %134 = vmatprep.subr.mxu0 0.0
    %135 = vmatpush1.msra.mxu0 0.0
    %136 = vmatprep.subr.mxu0 0.0
    %137 = vmatpush1.msra.mxu0 0.0
    %138 = vmatprep.subr.mxu0 0.0
    %139 = vmatpush1.msra.mxu0 0.0
    %140 = vmatprep.subr.mxu0 0.0
    %141 = vmatpush1.msra.mxu0 0.0
    %142 = vmatprep.subr.mxu0 0.0
    %143 = vmatpush1.msra.mxu0 0.0
    %144 = vmatprep.subr.mxu0 0.0
    %145 = vmatpush1.msra.mxu0 0.0
    %146 = vmatprep.subr.mxu0 0.0
    %147 = vmatpush1.msra.mxu0 0.0
    %148 = vmatprep.subr.mxu0 0.0
    %149 = vmatpush1.msra.mxu0 0.0
    %150 = vmatprep.subr.mxu0 0.0
    %151 = vmatpush1.msra.mxu0 0.0
    %152 = vmatprep.subr.mxu0 0.0
    %153 = vmatpush1.msra.mxu0 0.0
    %154 = vmatprep.subr.mxu0 0.0
    %155 = vmatpush1.msra.mxu0 0.0
    %156 = vmatprep.subr.mxu0 0.0
    %157 = vmatpush1.msra.mxu0 0.0
    %158 = vmatprep.subr.mxu0 0.0
    %159 = vmatpush1.msra.mxu0 0.0
    %160 = vmatprep.subr.mxu0 0.0
    %161 = vmatpush1.msra.mxu0 0.0
    %162 = vmatprep.mubr.f32.mxu0 0.0
    %163 = vmatmul.mubr.f32.gmra.mrb[0].mxu0 %v87
    %v164 = vpop.f32.mrb[0].mxu0
    %v165 = vadd.f32 0.0, %v164
    %v166 = vpop.f32.mrb[0].mxu0
    %v167 = vadd.f32 0.0, %v166
    %168 = vmatprep.mubr.f32.mxu0 0.0
    %169 = vmatmul.mubr.f32.gmra.mrb[0].mxu0 %v90
    %v170 = vpop.f32.mrb[0].mxu0
    %v171 = vadd.f32 0.0, %v170
    %v172 = vpop.f32.mrb[0].mxu0
    %v173 = vadd.f32 0.0, %v172
    %174 = vmatprep.mubr.f32.mxu0 0.0
    %175 = vmatmul.mubr.f32.gmra.mrb[0].mxu0 %v93
    %v176 = vpop.f32.mrb[0].mxu0
    %v177 = vadd.f32 0.0, %v176
    %v178 = vpop.f32.mrb[0].mxu0
    %v179 = vadd.f32 0.0, %v178
    %180 = vmatprep.mubr.f32.mxu0 0.0
    %181 = vmatmul.mubr.f32.gmra.mrb[0].mxu0 %v96
    %v182 = vpop.f32.mrb[0].mxu0
    %v183 = vadd.f32 0.0, %v182
    %v184 = vpop.f32.mrb[0].mxu0
    %v185 = vadd.f32 0.0, %v184
    %186 = vdwg.mxu0
    %187 = vmatprep.subr.mxu0 %v84
    %188 = vmatpush1.msra.mxu0 %v83
    %189 = vmatprep.subr.mxu0 0.0
    %190 = vmatpush1.msra.mxu0 0.0
    %191 = vmatprep.subr.mxu0 0.0
    %192 = vmatpush1.msra.mxu0 0.0
    %193 = vmatprep.subr.mxu0 0.0
    %194 = vmatpush1.msra.mxu0 0.0
    %195 = vmatprep.subr.mxu0 0.0
    %196 = vmatpush1.msra.mxu0 0.0
    %197 = vmatprep.subr.mxu0 0.0
    %198 = vmatpush1.msra.mxu0 0.0
    %199 = vmatprep.subr.mxu0 0.0
    %200 = vmatpush1.msra.mxu0 0.0
    %201 = vmatprep.subr.mxu0 0.0
    %202 = vmatpush1.msra.mxu0 0.0
    %203 = vmatprep.subr.mxu0 0.0
    %204 = vmatpush1.msra.mxu0 0.0
    %205 = vmatprep.subr.mxu0 0.0
    %206 = vmatpush1.msra.mxu0 0.0
    %207 = vmatprep.subr.mxu0 0.0
    %208 = vmatpush1.msra.mxu0 0.0
    %209 = vmatprep.subr.mxu0 0.0
    %210 = vmatpush1.msra.mxu0 0.0
    %211 = vmatprep.subr.mxu0 0.0
    %212 = vmatpush1.msra.mxu0 0.0
    %213 = vmatprep.subr.mxu0 0.0
    %214 = vmatpush1.msra.mxu0 0.0
    %215 = vmatprep.subr.mxu0 0.0
    %216 = vmatpush1.msra.mxu0 0.0
    %217 = vmatprep.subr.mxu0 0.0
    %218 = vmatpush1.msra.mxu0 0.0
    %219 = vmatprep.subr.mxu0 0.0
    %220 = vmatpush1.msra.mxu0 0.0
    %221 = vmatprep.subr.mxu0 0.0
    %222 = vmatpush1.msra.mxu0 0.0
    %223 = vmatprep.subr.mxu0 0.0
    %224 = vmatpush1.msra.mxu0 0.0
    %225 = vmatprep.subr.mxu0 0.0
    %226 = vmatpush1.msra.mxu0 0.0
    %227 = vmatprep.subr.mxu0 0.0
    %228 = vmatpush1.msra.mxu0 0.0
    %229 = vmatprep.subr.mxu0 0.0
    %230 = vmatpush1.msra.mxu0 0.0
    %231 = vmatprep.subr.mxu0 0.0
    %232 = vmatpush1.msra.mxu0 0.0
    %233 = vmatprep.subr.mxu0 0.0
    %234 = vmatpush1.msra.mxu0 0.0
    %235 = vmatprep.subr.mxu0 0.0
    %236 = vmatpush1.msra.mxu0 0.0
    %237 = vmatprep.subr.mxu0 0.0
    %238 = vmatpush1.msra.mxu0 0.0
    %239 = vmatprep.subr.mxu0 0.0
    %240 = vmatpush1.msra.mxu0 0.0
    %241 = vmatprep.subr.mxu0 0.0
    %242 = vmatpush1.msra.mxu0 0.0
    %243 = vmatprep.subr.mxu0 0.0
    %244 = vmatpush1.msra.mxu0 0.0
    %245 = vmatprep.subr.mxu0 0.0
    %246 = vmatpush1.msra.mxu0 0.0
    %247 = vmatprep.subr.mxu0 0.0
    %248 = vmatpush1.msra.mxu0 0.0
    %249 = vmatprep.subr.mxu0 0.0
    %250 = vmatpush1.msra.mxu0 0.0
    %251 = vmatprep.mubr.f32.mxu0 0.0
    %252 = vmatmul.mubr.f32.gmra.mrb[0].mxu0 %v87
    %v253 = vpop.f32.mrb[0].mxu0
    %v254 = vadd.f32 0.0, %v253
    %v255 = vpop.f32.mrb[0].mxu0
    %v256 = vadd.f32 0.0, %v255
    %257 = vmatprep.mubr.f32.mxu0 0.0
    %258 = vmatmul.mubr.f32.gmra.mrb[0].mxu0 %v90
    %v259 = vpop.f32.mrb[0].mxu0
    %v260 = vadd.f32 0.0, %v259
    %v261 = vpop.f32.mrb[0].mxu0
    %v262 = vadd.f32 0.0, %v261
    %263 = vmatprep.mubr.f32.mxu0 0.0
    %264 = vmatmul.mubr.f32.gmra.mrb[0].mxu0 %v93
    %v265 = vpop.f32.mrb[0].mxu0
    %v266 = vadd.f32 0.0, %v265
    %v267 = vpop.f32.mrb[0].mxu0
    %v268 = vadd.f32 0.0, %v267
    %269 = vmatprep.mubr.f32.mxu0 0.0
    %270 = vmatmul.mubr.f32.gmra.mrb[0].mxu0 %v96
    %v271 = vpop.f32.mrb[0].mxu0
    %v272 = vadd.f32 0.0, %v271
    %v273 = vpop.f32.mrb[0].mxu0
    %v274 = vadd.f32 0.0, %v273
    %275 = vdwg.mxu0
    %v276 = vmax.f32 %v165, 0.0
    %v277 = vmax.f32 %v167, 0.0
    %v278 = vmax.f32 %v254, 0.0
    %v279 = vmax.f32 %v256, 0.0
    %v280 = vmax.f32 %v171, 0.0
    %v281 = vmax.f32 %v173, 0.0
    %v282 = vmax.f32 %v260, 0.0
    %v283 = vmax.f32 %v262, 0.0
    %v284 = vmax.f32 %v177, 0.0
    %v285 = vmax.f32 %v179, 0.0
    %v286 = vmax.f32 %v266, 0.0
    %v287 = vmax.f32 %v268, 0.0
    %v288 = vmax.f32 %v183, 0.0
    %v289 = vmax.f32 %v185, 0.0
    %v290 = vmax.f32 %v272, 0.0
    %v291 = vmax.f32 %v274, 0.0
    %vm292 = vcmask 261120
    %v294 = vsel %vm292, %v76, 0
    %v297 = vsel %vm292, %v77, 0
    %v300 = vsel %vm292, %v78, 0
    %v303 = vsel %vm292, %v79, 0
    %305 = vmatprep.subr.mxu0 %v277
    %306 = vmatpush1.msra.mxu0 %v276
    %307 = vmatprep.subr.mxu0 %v281
    %308 = vmatpush1.msra.mxu0 %v280
    %309 = vmatprep.subr.mxu0 %v285
    %310 = vmatpush1.msra.mxu0 %v284
    %311 = vmatprep.subr.mxu0 %v289
    %312 = vmatpush1.msra.mxu0 %v288
    %313 = vmatprep.subr.mxu0 0.0
    %314 = vmatpush1.msra.mxu0 0.0
    %315 = vmatprep.subr.mxu0 0.0
    %316 = vmatpush1.msra.mxu0 0.0
    %317 = vmatprep.subr.mxu0 0.0
    %318 = vmatpush1.msra.mxu0 0.0
    %319 = vmatprep.subr.mxu0 0.0
    %320 = vmatpush1.msra.mxu0 0.0
    %321 = vmatprep.subr.mxu0 0.0
    %322 = vmatpush1.msra.mxu0 0.0
    %323 = vmatprep.subr.mxu0 0.0
    %324 = vmatpush1.msra.mxu0 0.0
    %325 = vmatprep.subr.mxu0 0.0
    %326 = vmatpush1.msra.mxu0 0.0
    %327 = vmatprep.subr.mxu0 0.0
    %328 = vmatpush1.msra.mxu0 0.0
    %329 = vmatprep.subr.mxu0 0.0
    %330 = vmatpush1.msra.mxu0 0.0
    %331 = vmatprep.subr.mxu0 0.0
    %332 = vmatpush1.msra.mxu0 0.0
    %333 = vmatprep.subr.mxu0 0.0
    %334 = vmatpush1.msra.mxu0 0.0
    %335 = vmatprep.subr.mxu0 0.0
    %336 = vmatpush1.msra.mxu0 0.0
    %337 = vmatprep.subr.mxu0 0.0
    %338 = vmatpush1.msra.mxu0 0.0
    %339 = vmatprep.subr.mxu0 0.0
    %340 = vmatpush1.msra.mxu0 0.0
    %341 = vmatprep.subr.mxu0 0.0
    %342 = vmatpush1.msra.mxu0 0.0
    %343 = vmatprep.subr.mxu0 0.0
    %344 = vmatpush1.msra.mxu0 0.0
    %345 = vmatprep.subr.mxu0 0.0
    %346 = vmatpush1.msra.mxu0 0.0
    %347 = vmatprep.subr.mxu0 0.0
    %348 = vmatpush1.msra.mxu0 0.0
    %349 = vmatprep.subr.mxu0 0.0
    %350 = vmatpush1.msra.mxu0 0.0
    %351 = vmatprep.subr.mxu0 0.0
    %352 = vmatpush1.msra.mxu0 0.0
    %353 = vmatprep.subr.mxu0 0.0
    %354 = vmatpush1.msra.mxu0 0.0
    %355 = vmatprep.subr.mxu0 0.0
    %356 = vmatpush1.msra.mxu0 0.0
    %357 = vmatprep.subr.mxu0 0.0
    %358 = vmatpush1.msra.mxu0 0.0
    %359 = vmatprep.subr.mxu0 0.0
    %360 = vmatpush1.msra.mxu0 0.0
    %361 = vmatprep.subr.mxu0 0.0
    %362 = vmatpush1.msra.mxu0 0.0
    %363 = vmatprep.subr.mxu0 0.0
    %364 = vmatpush1.msra.mxu0 0.0
    %365 = vmatprep.subr.mxu0 0.0
    %366 = vmatpush1.msra.mxu0 0.0
    %367 = vmatprep.subr.mxu0 0.0
    %368 = vmatpush1.msra.mxu0 0.0
    %369 = vmatprep.mubr.f32.mxu0 0.0
    %370 = vmatmul.mubr.f32.gmra.mrb[0].mxu0 %v294
    %v371 = vpop.f32.mrb[0].mxu0
    %v372 = vadd.f32 0.0, %v371
    %v373 = vpop.f32.mrb[0].mxu0
    %v374 = vadd.f32 0.0, %v373
    %375 = vmatprep.mubr.f32.mxu0 0.0
    %376 = vmatmul.mubr.f32.gmra.mrb[0].mxu0 %v297
    %v377 = vpop.f32.mrb[0].mxu0
    %v378 = vadd.f32 0.0, %v377
    %v379 = vpop.f32.mrb[0].mxu0
    %v380 = vadd.f32 0.0, %v379
    %381 = vmatprep.mubr.f32.mxu0 0.0
    %382 = vmatmul.mubr.f32.gmra.mrb[0].mxu0 %v300
    %v383 = vpop.f32.mrb[0].mxu0
    %v384 = vadd.f32 0.0, %v383
    %v385 = vpop.f32.mrb[0].mxu0
    %v386 = vadd.f32 0.0, %v385
    %387 = vmatprep.mubr.f32.mxu0 0.0
    %388 = vmatmul.mubr.f32.gmra.mrb[0].mxu0 %v303
    %v389 = vpop.f32.mrb[0].mxu0
    %v390 = vadd.f32 0.0, %v389
    %v391 = vpop.f32.mrb[0].mxu0
    %v392 = vadd.f32 0.0, %v391
    %393 = vdwg.mxu0
    %394 = vmatprep.subr.mxu0 %v279
    %395 = vmatpush1.msra.mxu0 %v278
    %396 = vmatprep.subr.mxu0 %v283
    %397 = vmatpush1.msra.mxu0 %v282
    %398 = vmatprep.subr.mxu0 %v287
    %399 = vmatpush1.msra.mxu0 %v286
    %400 = vmatprep.subr.mxu0 %v291
    %401 = vmatpush1.msra.mxu0 %v290
    %402 = vmatprep.subr.mxu0 0.0
    %403 = vmatpush1.msra.mxu0 0.0
    %404 = vmatprep.subr.mxu0 0.0
    %405 = vmatpush1.msra.mxu0 0.0
    %406 = vmatprep.subr.mxu0 0.0
    %407 = vmatpush1.msra.mxu0 0.0
    %408 = vmatprep.subr.mxu0 0.0
    %409 = vmatpush1.msra.mxu0 0.0
    %410 = vmatprep.subr.mxu0 0.0
    %411 = vmatpush1.msra.mxu0 0.0
    %412 = vmatprep.subr.mxu0 0.0
    %413 = vmatpush1.msra.mxu0 0.0
    %414 = vmatprep.subr.mxu0 0.0
    %415 = vmatpush1.msra.mxu0 0.0
    %416 = vmatprep.subr.mxu0 0.0
    %417 = vmatpush1.msra.mxu0 0.0
    %418 = vmatprep.subr.mxu0 0.0
    %419 = vmatpush1.msra.mxu0 0.0
    %420 = vmatprep.subr.mxu0 0.0
    %421 = vmatpush1.msra.mxu0 0.0
    %422 = vmatprep.subr.mxu0 0.0
    %423 = vmatpush1.msra.mxu0 0.0
    %424 = vmatprep.subr.mxu0 0.0
    %425 = vmatpush1.msra.mxu0 0.0
    %426 = vmatprep.subr.mxu0 0.0
    %427 = vmatpush1.msra.mxu0 0.0
    %428 = vmatprep.subr.mxu0 0.0
    %429 = vmatpush1.msra.mxu0 0.0
    %430 = vmatprep.subr.mxu0 0.0
    %431 = vmatpush1.msra.mxu0 0.0
    %432 = vmatprep.subr.mxu0 0.0
    %433 = vmatpush1.msra.mxu0 0.0
    %434 = vmatprep.subr.mxu0 0.0
    %435 = vmatpush1.msra.mxu0 0.0
    %436 = vmatprep.subr.mxu0 0.0
    %437 = vmatpush1.msra.mxu0 0.0
    %438 = vmatprep.subr.mxu0 0.0
    %439 = vmatpush1.msra.mxu0 0.0
    %440 = vmatprep.subr.mxu0 0.0
    %441 = vmatpush1.msra.mxu0 0.0
    %442 = vmatprep.subr.mxu0 0.0
    %443 = vmatpush1.msra.mxu0 0.0
    %444 = vmatprep.subr.mxu0 0.0
    %445 = vmatpush1.msra.mxu0 0.0
    %446 = vmatprep.subr.mxu0 0.0
    %447 = vmatpush1.msra.mxu0 0.0
    %448 = vmatprep.subr.mxu0 0.0
    %449 = vmatpush1.msra.mxu0 0.0
    %450 = vmatprep.subr.mxu0 0.0
    %451 = vmatpush1.msra.mxu0 0.0
    %452 = vmatprep.subr.mxu0 0.0
    %453 = vmatpush1.msra.mxu0 0.0
    %454 = vmatprep.subr.mxu0 0.0
    %455 = vmatpush1.msra.mxu0 0.0
    %456 = vmatprep.subr.mxu0 0.0
    %457 = vmatpush1.msra.mxu0 0.0
    %458 = vmatprep.mubr.f32.mxu0 0.0
    %459 = vmatmul.mubr.f32.gmra.mrb[0].mxu0 %v294
    %v460 = vpop.f32.mrb[0].mxu0
    %v461 = vadd.f32 0.0, %v460
    %v462 = vpop.f32.mrb[0].mxu0
    %v463 = vadd.f32 0.0, %v462
    %464 = vmatprep.mubr.f32.mxu0 0.0
    %465 = vmatmul.mubr.f32.gmra.mrb[0].mxu0 %v297
    %v466 = vpop.f32.mrb[0].mxu0
    %v467 = vadd.f32 0.0, %v466
    %v468 = vpop.f32.mrb[0].mxu0
    %v469 = vadd.f32 0.0, %v468
    %470 = vmatprep.mubr.f32.mxu0 0.0
    %471 = vmatmul.mubr.f32.gmra.mrb[0].mxu0 %v300
    %v472 = vpop.f32.mrb[0].mxu0
    %v473 = vadd.f32 0.0, %v472
    %v474 = vpop.f32.mrb[0].mxu0
    %v475 = vadd.f32 0.0, %v474
    %476 = vmatprep.mubr.f32.mxu0 0.0
    %477 = vmatmul.mubr.f32.gmra.mrb[0].mxu0 %v303
    %v478 = vpop.f32.mrb[0].mxu0
    %v479 = vadd.f32 0.0, %v478
    %v480 = vpop.f32.mrb[0].mxu0
    %v481 = vadd.f32 0.0, %v480
    %482 = vdwg.mxu0
    %v483 = vmax.f32 %v372, 0.0
    %v484 = vmax.f32 %v374, 0.0
    %v485 = vmax.f32 %v461, 0.0
    %v486 = vmax.f32 %v463, 0.0
    %v487 = vmax.f32 %v378, 0.0
    %v488 = vmax.f32 %v380, 0.0
    %v489 = vmax.f32 %v467, 0.0
    %v490 = vmax.f32 %v469, 0.0
    %v491 = vmax.f32 %v384, 0.0
    %v492 = vmax.f32 %v386, 0.0
    %v493 = vmax.f32 %v473, 0.0
    %v494 = vmax.f32 %v475, 0.0
    %v495 = vmax.f32 %v390, 0.0
    %v496 = vmax.f32 %v392, 0.0
    %v497 = vmax.f32 %v479, 0.0
    %v498 = vmax.f32 %v481, 0.0
    %v500 = vsel %vm292, %v80, 0
    %502 = vmatprep.subr.mxu0 %v484
    %503 = vmatpush1.msra.mxu0 %v483
    %504 = vmatprep.subr.mxu0 %v488
    %505 = vmatpush1.msra.mxu0 %v487
    %506 = vmatprep.subr.mxu0 %v492
    %507 = vmatpush1.msra.mxu0 %v491
    %508 = vmatprep.subr.mxu0 %v496
    %509 = vmatpush1.msra.mxu0 %v495
    %510 = vmatprep.subr.mxu0 0.0
    %511 = vmatpush1.msra.mxu0 0.0
    %512 = vmatprep.subr.mxu0 0.0
    %513 = vmatpush1.msra.mxu0 0.0
    %514 = vmatprep.subr.mxu0 0.0
    %515 = vmatpush1.msra.mxu0 0.0
    %516 = vmatprep.subr.mxu0 0.0
    %517 = vmatpush1.msra.mxu0 0.0
    %518 = vmatprep.subr.mxu0 0.0
    %519 = vmatpush1.msra.mxu0 0.0
    %520 = vmatprep.subr.mxu0 0.0
    %521 = vmatpush1.msra.mxu0 0.0
    %522 = vmatprep.subr.mxu0 0.0
    %523 = vmatpush1.msra.mxu0 0.0
    %524 = vmatprep.subr.mxu0 0.0
    %525 = vmatpush1.msra.mxu0 0.0
    %526 = vmatprep.subr.mxu0 0.0
    %527 = vmatpush1.msra.mxu0 0.0
    %528 = vmatprep.subr.mxu0 0.0
    %529 = vmatpush1.msra.mxu0 0.0
    %530 = vmatprep.subr.mxu0 0.0
    %531 = vmatpush1.msra.mxu0 0.0
    %532 = vmatprep.subr.mxu0 0.0
    %533 = vmatpush1.msra.mxu0 0.0
    %534 = vmatprep.subr.mxu0 0.0
    %535 = vmatpush1.msra.mxu0 0.0
    %536 = vmatprep.subr.mxu0 0.0
    %537 = vmatpush1.msra.mxu0 0.0
    %538 = vmatprep.subr.mxu0 0.0
    %539 = vmatpush1.msra.mxu0 0.0
    %540 = vmatprep.subr.mxu0 0.0
    %541 = vmatpush1.msra.mxu0 0.0
    %542 = vmatprep.subr.mxu0 0.0
    %543 = vmatpush1.msra.mxu0 0.0
    %544 = vmatprep.subr.mxu0 0.0
    %545 = vmatpush1.msra.mxu0 0.0
    %546 = vmatprep.subr.mxu0 0.0
    %547 = vmatpush1.msra.mxu0 0.0
    %548 = vmatprep.subr.mxu0 0.0
    %549 = vmatpush1.msra.mxu0 0.0
    %550 = vmatprep.subr.mxu0 0.0
    %551 = vmatpush1.msra.mxu0 0.0
    %552 = vmatprep.subr.mxu0 0.0
    %553 = vmatpush1.msra.mxu0 0.0
    %554 = vmatprep.subr.mxu0 0.0
    %555 = vmatpush1.msra.mxu0 0.0
    %556 = vmatprep.subr.mxu0 0.0
    %557 = vmatpush1.msra.mxu0 0.0
    %558 = vmatprep.subr.mxu0 0.0
    %559 = vmatpush1.msra.mxu0 0.0
    %560 = vmatprep.subr.mxu0 0.0
    %561 = vmatpush1.msra.mxu0 0.0
    %562 = vmatprep.subr.mxu0 0.0
    %563 = vmatpush1.msra.mxu0 0.0
    %564 = vmatprep.subr.mxu0 0.0
    %565 = vmatpush1.msra.mxu0 0.0
    %566 = vmatprep.mubr.f32.mxu0 0.0
    %567 = vmatmul.mubr.f32.gmra.mrb[0].mxu0 %v500
    %v568 = vpop.f32.mrb[0].mxu0
    %v569 = vadd.f32 0.0, %v568
    %v570 = vpop.f32.mrb[0].mxu0
    %v571 = vadd.f32 0.0, %v570
    %572 = vdwg.mxu0
    %573 = vmatprep.subr.mxu0 %v486
    %574 = vmatpush1.msra.mxu0 %v485
    %575 = vmatprep.subr.mxu0 %v490
    %576 = vmatpush1.msra.mxu0 %v489
    %577 = vmatprep.subr.mxu0 %v494
    %578 = vmatpush1.msra.mxu0 %v493
    %579 = vmatprep.subr.mxu0 %v498
    %580 = vmatpush1.msra.mxu0 %v497
    %581 = vmatprep.subr.mxu0 0.0
    %582 = vmatpush1.msra.mxu0 0.0
    %583 = vmatprep.subr.mxu0 0.0
    %584 = vmatpush1.msra.mxu0 0.0
    %585 = vmatprep.subr.mxu0 0.0
    %586 = vmatpush1.msra.mxu0 0.0
    %587 = vmatprep.subr.mxu0 0.0
    %588 = vmatpush1.msra.mxu0 0.0
    %589 = vmatprep.subr.mxu0 0.0
    %590 = vmatpush1.msra.mxu0 0.0
    %591 = vmatprep.subr.mxu0 0.0
    %592 = vmatpush1.msra.mxu0 0.0
    %593 = vmatprep.subr.mxu0 0.0
    %594 = vmatpush1.msra.mxu0 0.0
    %595 = vmatprep.subr.mxu0 0.0
    %596 = vmatpush1.msra.mxu0 0.0
    %597 = vmatprep.subr.mxu0 0.0
    %598 = vmatpush1.msra.mxu0 0.0
    %599 = vmatprep.subr.mxu0 0.0
    %600 = vmatpush1.msra.mxu0 0.0
    %601 = vmatprep.subr.mxu0 0.0
    %602 = vmatpush1.msra.mxu0 0.0
    %603 = vmatprep.subr.mxu0 0.0
    %604 = vmatpush1.msra.mxu0 0.0
    %605 = vmatprep.subr.mxu0 0.0
    %606 = vmatpush1.msra.mxu0 0.0
    %607 = vmatprep.subr.mxu0 0.0
    %608 = vmatpush1.msra.mxu0 0.0
    %609 = vmatprep.subr.mxu0 0.0
    %610 = vmatpush1.msra.mxu0 0.0
    %611 = vmatprep.subr.mxu0 0.0
    %612 = vmatpush1.msra.mxu0 0.0
    %613 = vmatprep.subr.mxu0 0.0
    %614 = vmatpush1.msra.mxu0 0.0
    %615 = vmatprep.subr.mxu0 0.0
    %616 = vmatpush1.msra.mxu0 0.0
    %617 = vmatprep.subr.mxu0 0.0
    %618 = vmatpush1.msra.mxu0 0.0
    %619 = vmatprep.subr.mxu0 0.0
    %620 = vmatpush1.msra.mxu0 0.0
    %621 = vmatprep.subr.mxu0 0.0
    %622 = vmatpush1.msra.mxu0 0.0
    %623 = vmatprep.subr.mxu0 0.0
    %624 = vmatpush1.msra.mxu0 0.0
    %625 = vmatprep.subr.mxu0 0.0
    %626 = vmatpush1.msra.mxu0 0.0
    %627 = vmatprep.subr.mxu0 0.0
    %628 = vmatpush1.msra.mxu0 0.0
    %629 = vmatprep.subr.mxu0 0.0
    %630 = vmatpush1.msra.mxu0 0.0
    %631 = vmatprep.subr.mxu0 0.0
    %632 = vmatpush1.msra.mxu0 0.0
    %633 = vmatprep.subr.mxu0 0.0
    %634 = vmatpush1.msra.mxu0 0.0
    %635 = vmatprep.subr.mxu0 0.0
    %636 = vmatpush1.msra.mxu0 0.0
    %637 = vmatprep.mubr.f32.mxu0 0.0
    %638 = vmatmul.mubr.f32.gmra.mrb[0].mxu0 %v500
    %v639 = vpop.f32.mrb[0].mxu0
    %v640 = vadd.f32 0.0, %v639
    %v641 = vpop.f32.mrb[0].mxu0
    %v642 = vadd.f32 0.0, %v641
    %643 = vdwg.mxu0
    %v648 = vcombine.low %v569, %v571
    %v649 = vcombine.low %v640, %v642
    %652 = vst [vmem:[%s5] sm:$0x77] %v648
    %653 = vst [vmem:[%s5 + $0x8] sm:$0x77] %v649
    %s654 = scalar_lea.vmem [#allocation7], 32
    %v655 = vld [vmem:[%s654] sm:$0xff]
    %v656 = vld [vmem:[%s654 + $0x8] sm:$0xff]
    %v657 = vld [vmem:[%s654 + $0x10] sm:$0xff]
    %v658 = vld [vmem:[%s654 + $0x18] sm:$0xff]
    %659 = vmatprep.subr.mxu0 %v656
    %660 = vmatpush1.msra.mxu0 %v655
    %661 = vmatprep.subr.mxu0 0.0
    %662 = vmatpush1.msra.mxu0 0.0
    %663 = vmatprep.subr.mxu0 0.0
    %664 = vmatpush1.msra.mxu0 0.0
    %665 = vmatprep.subr.mxu0 0.0
    %666 = vmatpush1.msra.mxu0 0.0
    %667 = vmatprep.subr.mxu0 0.0
    %668 = vmatpush1.msra.mxu0 0.0
    %669 = vmatprep.subr.mxu0 0.0
    %670 = vmatpush1.msra.mxu0 0.0
    %671 = vmatprep.subr.mxu0 0.0
    %672 = vmatpush1.msra.mxu0 0.0
    %673 = vmatprep.subr.mxu0 0.0
    %674 = vmatpush1.msra.mxu0 0.0
    %675 = vmatprep.subr.mxu0 0.0
    %676 = vmatpush1.msra.mxu0 0.0
    %677 = vmatprep.subr.mxu0 0.0
    %678 = vmatpush1.msra.mxu0 0.0
    %679 = vmatprep.subr.mxu0 0.0
    %680 = vmatpush1.msra.mxu0 0.0
    %681 = vmatprep.subr.mxu0 0.0
    %682 = vmatpush1.msra.mxu0 0.0
    %683 = vmatprep.subr.mxu0 0.0
    %684 = vmatpush1.msra.mxu0 0.0
    %685 = vmatprep.subr.mxu0 0.0
    %686 = vmatpush1.msra.mxu0 0.0
    %687 = vmatprep.subr.mxu0 0.0
    %688 = vmatpush1.msra.mxu0 0.0
    %689 = vmatprep.subr.mxu0 0.0
    %690 = vmatpush1.msra.mxu0 0.0
    %691 = vmatprep.subr.mxu0 0.0
    %692 = vmatpush1.msra.mxu0 0.0
    %693 = vmatprep.subr.mxu0 0.0
    %694 = vmatpush1.msra.mxu0 0.0
    %695 = vmatprep.subr.mxu0 0.0
    %696 = vmatpush1.msra.mxu0 0.0
    %697 = vmatprep.subr.mxu0 0.0
    %698 = vmatpush1.msra.mxu0 0.0
    %699 = vmatprep.subr.mxu0 0.0
    %700 = vmatpush1.msra.mxu0 0.0
    %701 = vmatprep.subr.mxu0 0.0
    %702 = vmatpush1.msra.mxu0 0.0
    %703 = vmatprep.subr.mxu0 0.0
    %704 = vmatpush1.msra.mxu0 0.0
    %705 = vmatprep.subr.mxu0 0.0
    %706 = vmatpush1.msra.mxu0 0.0
    %707 = vmatprep.subr.mxu0 0.0
    %708 = vmatpush1.msra.mxu0 0.0
    %709 = vmatprep.subr.mxu0 0.0
    %710 = vmatpush1.msra.mxu0 0.0
    %711 = vmatprep.subr.mxu0 0.0
    %712 = vmatpush1.msra.mxu0 0.0
    %713 = vmatprep.subr.mxu0 0.0
    %714 = vmatpush1.msra.mxu0 0.0
    %715 = vmatprep.subr.mxu0 0.0
    %716 = vmatpush1.msra.mxu0 0.0
    %717 = vmatprep.subr.mxu0 0.0
    %718 = vmatpush1.msra.mxu0 0.0
    %719 = vmatprep.subr.mxu0 0.0
    %720 = vmatpush1.msra.mxu0 0.0
    %721 = vmatprep.subr.mxu0 0.0
    %722 = vmatpush1.msra.mxu0 0.0
    %723 = vmatprep.mubr.f32.mxu0 0.0
    %724 = vmatmul.mubr.f32.gmra.mrb[0].mxu0 %v87
    %v725 = vpop.f32.mrb[0].mxu0
    %v726 = vadd.f32 0.0, %v725
    %v727 = vpop.f32.mrb[0].mxu0
    %v728 = vadd.f32 0.0, %v727
    %729 = vmatprep.mubr.f32.mxu0 0.0
    %730 = vmatmul.mubr.f32.gmra.mrb[0].mxu0 %v90
    %v731 = vpop.f32.mrb[0].mxu0
    %v732 = vadd.f32 0.0, %v731
    %v733 = vpop.f32.mrb[0].mxu0
    %v734 = vadd.f32 0.0, %v733
    %735 = vmatprep.mubr.f32.mxu0 0.0
    %736 = vmatmul.mubr.f32.gmra.mrb[0].mxu0 %v93
    %v737 = vpop.f32.mrb[0].mxu0
    %v738 = vadd.f32 0.0, %v737
    %v739 = vpop.f32.mrb[0].mxu0
    %v740 = vadd.f32 0.0, %v739
    %741 = vmatprep.mubr.f32.mxu0 0.0
    %742 = vmatmul.mubr.f32.gmra.mrb[0].mxu0 %v96
    %v743 = vpop.f32.mrb[0].mxu0
    %v744 = vadd.f32 0.0, %v743
    %v745 = vpop.f32.mrb[0].mxu0
    %v746 = vadd.f32 0.0, %v745
    %747 = vdwg.mxu0
    %748 = vmatprep.subr.mxu0 %v658
    %749 = vmatpush1.msra.mxu0 %v657
    %750 = vmatprep.subr.mxu0 0.0
    %751 = vmatpush1.msra.mxu0 0.0
    %752 = vmatprep.subr.mxu0 0.0
    %753 = vmatpush1.msra.mxu0 0.0
    %754 = vmatprep.subr.mxu0 0.0
    %755 = vmatpush1.msra.mxu0 0.0
    %756 = vmatprep.subr.mxu0 0.0
    %757 = vmatpush1.msra.mxu0 0.0
    %758 = vmatprep.subr.mxu0 0.0
    %759 = vmatpush1.msra.mxu0 0.0
    %760 = vmatprep.subr.mxu0 0.0
    %761 = vmatpush1.msra.mxu0 0.0
    %762 = vmatprep.subr.mxu0 0.0
    %763 = vmatpush1.msra.mxu0 0.0
    %764 = vmatprep.subr.mxu0 0.0
    %765 = vmatpush1.msra.mxu0 0.0
    %766 = vmatprep.subr.mxu0 0.0
    %767 = vmatpush1.msra.mxu0 0.0
    %768 = vmatprep.subr.mxu0 0.0
    %769 = vmatpush1.msra.mxu0 0.0
    %770 = vmatprep.subr.mxu0 0.0
    %771 = vmatpush1.msra.mxu0 0.0
    %772 = vmatprep.subr.mxu0 0.0
    %773 = vmatpush1.msra.mxu0 0.0
    %774 = vmatprep.subr.mxu0 0.0
    %775 = vmatpush1.msra.mxu0 0.0
    %776 = vmatprep.subr.mxu0 0.0
    %777 = vmatpush1.msra.mxu0 0.0
    %778 = vmatprep.subr.mxu0 0.0
    %779 = vmatpush1.msra.mxu0 0.0
    %780 = vmatprep.subr.mxu0 0.0
    %781 = vmatpush1.msra.mxu0 0.0
    %782 = vmatprep.subr.mxu0 0.0
    %783 = vmatpush1.msra.mxu0 0.0
    %784 = vmatprep.subr.mxu0 0.0
    %785 = vmatpush1.msra.mxu0 0.0
    %786 = vmatprep.subr.mxu0 0.0
    %787 = vmatpush1.msra.mxu0 0.0
    %788 = vmatprep.subr.mxu0 0.0
    %789 = vmatpush1.msra.mxu0 0.0
    %790 = vmatprep.subr.mxu0 0.0
    %791 = vmatpush1.msra.mxu0 0.0
    %792 = vmatprep.subr.mxu0 0.0
    %793 = vmatpush1.msra.mxu0 0.0
    %794 = vmatprep.subr.mxu0 0.0
    %795 = vmatpush1.msra.mxu0 0.0
    %796 = vmatprep.subr.mxu0 0.0
    %797 = vmatpush1.msra.mxu0 0.0
    %798 = vmatprep.subr.mxu0 0.0
    %799 = vmatpush1.msra.mxu0 0.0
    %800 = vmatprep.subr.mxu0 0.0
    %801 = vmatpush1.msra.mxu0 0.0
    %802 = vmatprep.subr.mxu0 0.0
    %803 = vmatpush1.msra.mxu0 0.0
    %804 = vmatprep.subr.mxu0 0.0
    %805 = vmatpush1.msra.mxu0 0.0
    %806 = vmatprep.subr.mxu0 0.0
    %807 = vmatpush1.msra.mxu0 0.0
    %808 = vmatprep.subr.mxu0 0.0
    %809 = vmatpush1.msra.mxu0 0.0
    %810 = vmatprep.subr.mxu0 0.0
    %811 = vmatpush1.msra.mxu0 0.0
    %812 = vmatprep.mubr.f32.mxu0 0.0
    %813 = vmatmul.mubr.f32.gmra.mrb[0].mxu0 %v87
    %v814 = vpop.f32.mrb[0].mxu0
    %v815 = vadd.f32 0.0, %v814
    %v816 = vpop.f32.mrb[0].mxu0
    %v817 = vadd.f32 0.0, %v816
    %818 = vmatprep.mubr.f32.mxu0 0.0
    %819 = vmatmul.mubr.f32.gmra.mrb[0].mxu0 %v90
    %v820 = vpop.f32.mrb[0].mxu0
    %v821 = vadd.f32 0.0, %v820
    %v822 = vpop.f32.mrb[0].mxu0
    %v823 = vadd.f32 0.0, %v822
    %824 = vmatprep.mubr.f32.mxu0 0.0
    %825 = vmatmul.mubr.f32.gmra.mrb[0].mxu0 %v93
    %v826 = vpop.f32.mrb[0].mxu0
    %v827 = vadd.f32 0.0, %v826
    %v828 = vpop.f32.mrb[0].mxu0
    %v829 = vadd.f32 0.0, %v828
    %830 = vmatprep.mubr.f32.mxu0 0.0
    %831 = vmatmul.mubr.f32.gmra.mrb[0].mxu0 %v96
    %v832 = vpop.f32.mrb[0].mxu0
    %v833 = vadd.f32 0.0, %v832
    %v834 = vpop.f32.mrb[0].mxu0
    %v835 = vadd.f32 0.0, %v834
    %836 = vdwg.mxu0
    %v837 = vmax.f32 %v726, 0.0
    %v838 = vmax.f32 %v728, 0.0
    %v839 = vmax.f32 %v815, 0.0
    %v840 = vmax.f32 %v817, 0.0
    %v841 = vmax.f32 %v732, 0.0
    %v842 = vmax.f32 %v734, 0.0
    %v843 = vmax.f32 %v821, 0.0
    %v844 = vmax.f32 %v823, 0.0
    %v845 = vmax.f32 %v738, 0.0
    %v846 = vmax.f32 %v740, 0.0
    %v847 = vmax.f32 %v827, 0.0
    %v848 = vmax.f32 %v829, 0.0
    %v849 = vmax.f32 %v744, 0.0
    %v850 = vmax.f32 %v746, 0.0
    %v851 = vmax.f32 %v833, 0.0
    %v852 = vmax.f32 %v835, 0.0
    %853 = vmatprep.subr.mxu0 %v838
    %854 = vmatpush1.msra.mxu0 %v837
    %855 = vmatprep.subr.mxu0 %v842
    %856 = vmatpush1.msra.mxu0 %v841
    %857 = vmatprep.subr.mxu0 %v846
    %858 = vmatpush1.msra.mxu0 %v845
    %859 = vmatprep.subr.mxu0 %v850
    %860 = vmatpush1.msra.mxu0 %v849
    %861 = vmatprep.subr.mxu0 0.0
    %862 = vmatpush1.msra.mxu0 0.0
    %863 = vmatprep.subr.mxu0 0.0
    %864 = vmatpush1.msra.mxu0 0.0
    %865 = vmatprep.subr.mxu0 0.0
    %866 = vmatpush1.msra.mxu0 0.0
    %867 = vmatprep.subr.mxu0 0.0
    %868 = vmatpush1.msra.mxu0 0.0
    %869 = vmatprep.subr.mxu0 0.0
    %870 = vmatpush1.msra.mxu0 0.0
    %871 = vmatprep.subr.mxu0 0.0
    %872 = vmatpush1.msra.mxu0 0.0
    %873 = vmatprep.subr.mxu0 0.0
    %874 = vmatpush1.msra.mxu0 0.0
    %875 = vmatprep.subr.mxu0 0.0
    %876 = vmatpush1.msra.mxu0 0.0
    %877 = vmatprep.subr.mxu0 0.0
    %878 = vmatpush1.msra.mxu0 0.0
    %879 = vmatprep.subr.mxu0 0.0
    %880 = vmatpush1.msra.mxu0 0.0
    %881 = vmatprep.subr.mxu0 0.0
    %882 = vmatpush1.msra.mxu0 0.0
    %883 = vmatprep.subr.mxu0 0.0
    %884 = vmatpush1.msra.mxu0 0.0
    %885 = vmatprep.subr.mxu0 0.0
    %886 = vmatpush1.msra.mxu0 0.0
    %887 = vmatprep.subr.mxu0 0.0
    %888 = vmatpush1.msra.mxu0 0.0
    %889 = vmatprep.subr.mxu0 0.0
    %890 = vmatpush1.msra.mxu0 0.0
    %891 = vmatprep.subr.mxu0 0.0
    %892 = vmatpush1.msra.mxu0 0.0
    %893 = vmatprep.subr.mxu0 0.0
    %894 = vmatpush1.msra.mxu0 0.0
    %895 = vmatprep.subr.mxu0 0.0
    %896 = vmatpush1.msra.mxu0 0.0
    %897 = vmatprep.subr.mxu0 0.0
    %898 = vmatpush1.msra.mxu0 0.0
    %899 = vmatprep.subr.mxu0 0.0
    %900 = vmatpush1.msra.mxu0 0.0
    %901 = vmatprep.subr.mxu0 0.0
    %902 = vmatpush1.msra.mxu0 0.0
    %903 = vmatprep.subr.mxu0 0.0
    %904 = vmatpush1.msra.mxu0 0.0
    %905 = vmatprep.subr.mxu0 0.0
    %906 = vmatpush1.msra.mxu0 0.0
    %907 = vmatprep.subr.mxu0 0.0
    %908 = vmatpush1.msra.mxu0 0.0
    %909 = vmatprep.subr.mxu0 0.0
    %910 = vmatpush1.msra.mxu0 0.0
    %911 = vmatprep.subr.mxu0 0.0
    %912 = vmatpush1.msra.mxu0 0.0
    %913 = vmatprep.subr.mxu0 0.0
    %914 = vmatpush1.msra.mxu0 0.0
    %915 = vmatprep.subr.mxu0 0.0
    %916 = vmatpush1.msra.mxu0 0.0
    %917 = vmatprep.mubr.f32.mxu0 0.0
    %918 = vmatmul.mubr.f32.gmra.mrb[0].mxu0 %v294
    %v919 = vpop.f32.mrb[0].mxu0
    %v920 = vadd.f32 0.0, %v919
    %v921 = vpop.f32.mrb[0].mxu0
    %v922 = vadd.f32 0.0, %v921
    %923 = vmatprep.mubr.f32.mxu0 0.0
    %924 = vmatmul.mubr.f32.gmra.mrb[0].mxu0 %v297
    %v925 = vpop.f32.mrb[0].mxu0
    %v926 = vadd.f32 0.0, %v925
    %v927 = vpop.f32.mrb[0].mxu0
    %v928 = vadd.f32 0.0, %v927
    %929 = vmatprep.mubr.f32.mxu0 0.0
    %930 = vmatmul.mubr.f32.gmra.mrb[0].mxu0 %v300
    %v931 = vpop.f32.mrb[0].mxu0
    %v932 = vadd.f32 0.0, %v931
    %v933 = vpop.f32.mrb[0].mxu0
    %v934 = vadd.f32 0.0, %v933
    %935 = vmatprep.mubr.f32.mxu0 0.0
    %936 = vmatmul.mubr.f32.gmra.mrb[0].mxu0 %v303
    %v937 = vpop.f32.mrb[0].mxu0
    %v938 = vadd.f32 0.0, %v937
    %v939 = vpop.f32.mrb[0].mxu0
    %v940 = vadd.f32 0.0, %v939
    %941 = vdwg.mxu0
    %942 = vmatprep.subr.mxu0 %v840
    %943 = vmatpush1.msra.mxu0 %v839
    %944 = vmatprep.subr.mxu0 %v844
    %945 = vmatpush1.msra.mxu0 %v843
    %946 = vmatprep.subr.mxu0 %v848
    %947 = vmatpush1.msra.mxu0 %v847
    %948 = vmatprep.subr.mxu0 %v852
    %949 = vmatpush1.msra.mxu0 %v851
    %950 = vmatprep.subr.mxu0 0.0
    %951 = vmatpush1.msra.mxu0 0.0
    %952 = vmatprep.subr.mxu0 0.0
    %953 = vmatpush1.msra.mxu0 0.0
    %954 = vmatprep.subr.mxu0 0.0
    %955 = vmatpush1.msra.mxu0 0.0
    %956 = vmatprep.subr.mxu0 0.0
    %957 = vmatpush1.msra.mxu0 0.0
    %958 = vmatprep.subr.mxu0 0.0
    %959 = vmatpush1.msra.mxu0 0.0
    %960 = vmatprep.subr.mxu0 0.0
    %961 = vmatpush1.msra.mxu0 0.0
    %962 = vmatprep.subr.mxu0 0.0
    %963 = vmatpush1.msra.mxu0 0.0
    %964 = vmatprep.subr.mxu0 0.0
    %965 = vmatpush1.msra.mxu0 0.0
    %966 = vmatprep.subr.mxu0 0.0
    %967 = vmatpush1.msra.mxu0 0.0
    %968 = vmatprep.subr.mxu0 0.0
    %969 = vmatpush1.msra.mxu0 0.0
    %970 = vmatprep.subr.mxu0 0.0
    %971 = vmatpush1.msra.mxu0 0.0
    %972 = vmatprep.subr.mxu0 0.0
    %973 = vmatpush1.msra.mxu0 0.0
    %974 = vmatprep.subr.mxu0 0.0
    %975 = vmatpush1.msra.mxu0 0.0
    %976 = vmatprep.subr.mxu0 0.0
    %977 = vmatpush1.msra.mxu0 0.0
    %978 = vmatprep.subr.mxu0 0.0
    %979 = vmatpush1.msra.mxu0 0.0
    %980 = vmatprep.subr.mxu0 0.0
    %981 = vmatpush1.msra.mxu0 0.0
    %982 = vmatprep.subr.mxu0 0.0
    %983 = vmatpush1.msra.mxu0 0.0
    %984 = vmatprep.subr.mxu0 0.0
    %985 = vmatpush1.msra.mxu0 0.0
    %986 = vmatprep.subr.mxu0 0.0
    %987 = vmatpush1.msra.mxu0 0.0
    %988 = vmatprep.subr.mxu0 0.0
    %989 = vmatpush1.msra.mxu0 0.0
    %990 = vmatprep.subr.mxu0 0.0
    %991 = vmatpush1.msra.mxu0 0.0
    %992 = vmatprep.subr.mxu0 0.0
    %993 = vmatpush1.msra.mxu0 0.0
    %994 = vmatprep.subr.mxu0 0.0
    %995 = vmatpush1.msra.mxu0 0.0
    %996 = vmatprep.subr.mxu0 0.0
    %997 = vmatpush1.msra.mxu0 0.0
    %998 = vmatprep.subr.mxu0 0.0
    %999 = vmatpush1.msra.mxu0 0.0
    %1000 = vmatprep.subr.mxu0 0.0
    %1001 = vmatpush1.msra.mxu0 0.0
    %1002 = vmatprep.subr.mxu0 0.0
    %1003 = vmatpush1.msra.mxu0 0.0
    %1004 = vmatprep.subr.mxu0 0.0
    %1005 = vmatpush1.msra.mxu0 0.0
    %1006 = vmatprep.mubr.f32.mxu0 0.0
    %1007 = vmatmul.mubr.f32.gmra.mrb[0].mxu0 %v294
    %v1008 = vpop.f32.mrb[0].mxu0
    %v1009 = vadd.f32 0.0, %v1008
    %v1010 = vpop.f32.mrb[0].mxu0
    %v1011 = vadd.f32 0.0, %v1010
    %1012 = vmatprep.mubr.f32.mxu0 0.0
    %1013 = vmatmul.mubr.f32.gmra.mrb[0].mxu0 %v297
    %v1014 = vpop.f32.mrb[0].mxu0
    %v1015 = vadd.f32 0.0, %v1014
    %v1016 = vpop.f32.mrb[0].mxu0
    %v1017 = vadd.f32 0.0, %v1016
    %1018 = vmatprep.mubr.f32.mxu0 0.0
    %1019 = vmatmul.mubr.f32.gmra.mrb[0].mxu0 %v300
    %v1020 = vpop.f32.mrb[0].mxu0
    %v1021 = vadd.f32 0.0, %v1020
    %v1022 = vpop.f32.mrb[0].mxu0
    %v1023 = vadd.f32 0.0, %v1022
    %1024 = vmatprep.mubr.f32.mxu0 0.0
    %1025 = vmatmul.mubr.f32.gmra.mrb[0].mxu0 %v303
    %v1026 = vpop.f32.mrb[0].mxu0
    %v1027 = vadd.f32 0.0, %v1026
    %v1028 = vpop.f32.mrb[0].mxu0
    %v1029 = vadd.f32 0.0, %v1028
    %1030 = vdwg.mxu0
    %v1031 = vmax.f32 %v920, 0.0
    %v1032 = vmax.f32 %v922, 0.0
    %v1033 = vmax.f32 %v1009, 0.0
    %v1034 = vmax.f32 %v1011, 0.0
    %v1035 = vmax.f32 %v926, 0.0
    %v1036 = vmax.f32 %v928, 0.0
    %v1037 = vmax.f32 %v1015, 0.0
    %v1038 = vmax.f32 %v1017, 0.0
    %v1039 = vmax.f32 %v932, 0.0
    %v1040 = vmax.f32 %v934, 0.0
    %v1041 = vmax.f32 %v1021, 0.0
    %v1042 = vmax.f32 %v1023, 0.0
    %v1043 = vmax.f32 %v938, 0.0
    %v1044 = vmax.f32 %v940, 0.0
    %v1045 = vmax.f32 %v1027, 0.0
    %v1046 = vmax.f32 %v1029, 0.0
    %1047 = vmatprep.subr.mxu0 %v1032
    %1048 = vmatpush1.msra.mxu0 %v1031
    %1049 = vmatprep.subr.mxu0 %v1036
    %1050 = vmatpush1.msra.mxu0 %v1035
    %1051 = vmatprep.subr.mxu0 %v1040
    %1052 = vmatpush1.msra.mxu0 %v1039
    %1053 = vmatprep.subr.mxu0 %v1044
    %1054 = vmatpush1.msra.mxu0 %v1043
    %1055 = vmatprep.subr.mxu0 0.0
    %1056 = vmatpush1.msra.mxu0 0.0
    %1057 = vmatprep.subr.mxu0 0.0
    %1058 = vmatpush1.msra.mxu0 0.0
    %1059 = vmatprep.subr.mxu0 0.0
    %1060 = vmatpush1.msra.mxu0 0.0
    %1061 = vmatprep.subr.mxu0 0.0
    %1062 = vmatpush1.msra.mxu0 0.0
    %1063 = vmatprep.subr.mxu0 0.0
    %1064 = vmatpush1.msra.mxu0 0.0
    %1065 = vmatprep.subr.mxu0 0.0
    %1066 = vmatpush1.msra.mxu0 0.0
    %1067 = vmatprep.subr.mxu0 0.0
    %1068 = vmatpush1.msra.mxu0 0.0
    %1069 = vmatprep.subr.mxu0 0.0
    %1070 = vmatpush1.msra.mxu0 0.0
    %1071 = vmatprep.subr.mxu0 0.0
    %1072 = vmatpush1.msra.mxu0 0.0
    %1073 = vmatprep.subr.mxu0 0.0
    %1074 = vmatpush1.msra.mxu0 0.0
    %1075 = vmatprep.subr.mxu0 0.0
    %1076 = vmatpush1.msra.mxu0 0.0
    %1077 = vmatprep.subr.mxu0 0.0
    %1078 = vmatpush1.msra.mxu0 0.0
    %1079 = vmatprep.subr.mxu0 0.0
    %1080 = vmatpush1.msra.mxu0 0.0
    %1081 = vmatprep.subr.mxu0 0.0
    %1082 = vmatpush1.msra.mxu0 0.0
    %1083 = vmatprep.subr.mxu0 0.0
    %1084 = vmatpush1.msra.mxu0 0.0
    %1085 = vmatprep.subr.mxu0 0.0
    %1086 = vmatpush1.msra.mxu0 0.0
    %1087 = vmatprep.subr.mxu0 0.0
    %1088 = vmatpush1.msra.mxu0 0.0
    %1089 = vmatprep.subr.mxu0 0.0
    %1090 = vmatpush1.msra.mxu0 0.0
    %1091 = vmatprep.subr.mxu0 0.0
    %1092 = vmatpush1.msra.mxu0 0.0
    %1093 = vmatprep.subr.mxu0 0.0
    %1094 = vmatpush1.msra.mxu0 0.0
    %1095 = vmatprep.subr.mxu0 0.0
    %1096 = vmatpush1.msra.mxu0 0.0
    %1097 = vmatprep.subr.mxu0 0.0
    %1098 = vmatpush1.msra.mxu0 0.0
    %1099 = vmatprep.subr.mxu0 0.0
    %1100 = vmatpush1.msra.mxu0 0.0
    %1101 = vmatprep.subr.mxu0 0.0
    %1102 = vmatpush1.msra.mxu0 0.0
    %1103 = vmatprep.subr.mxu0 0.0
    %1104 = vmatpush1.msra.mxu0 0.0
    %1105 = vmatprep.subr.mxu0 0.0
    %1106 = vmatpush1.msra.mxu0 0.0
    %1107 = vmatprep.subr.mxu0 0.0
    %1108 = vmatpush1.msra.mxu0 0.0
    %1109 = vmatprep.subr.mxu0 0.0
    %1110 = vmatpush1.msra.mxu0 0.0
    %1111 = vmatprep.mubr.f32.mxu0 0.0
    %1112 = vmatmul.mubr.f32.gmra.mrb[0].mxu0 %v500
    %v1113 = vpop.f32.mrb[0].mxu0
    %v1114 = vadd.f32 0.0, %v1113
    %v1115 = vpop.f32.mrb[0].mxu0
    %v1116 = vadd.f32 0.0, %v1115
    %1117 = vdwg.mxu0
    %1118 = vmatprep.subr.mxu0 %v1034
    %1119 = vmatpush1.msra.mxu0 %v1033
    %1120 = vmatprep.subr.mxu0 %v1038
    %1121 = vmatpush1.msra.mxu0 %v1037
    %1122 = vmatprep.subr.mxu0 %v1042
    %1123 = vmatpush1.msra.mxu0 %v1041
    %1124 = vmatprep.subr.mxu0 %v1046
    %1125 = vmatpush1.msra.mxu0 %v1045
    %1126 = vmatprep.subr.mxu0 0.0
    %1127 = vmatpush1.msra.mxu0 0.0
    %1128 = vmatprep.subr.mxu0 0.0
    %1129 = vmatpush1.msra.mxu0 0.0
    %1130 = vmatprep.subr.mxu0 0.0
    %1131 = vmatpush1.msra.mxu0 0.0
    %1132 = vmatprep.subr.mxu0 0.0
    %1133 = vmatpush1.msra.mxu0 0.0
    %1134 = vmatprep.subr.mxu0 0.0
    %1135 = vmatpush1.msra.mxu0 0.0
    %1136 = vmatprep.subr.mxu0 0.0
    %1137 = vmatpush1.msra.mxu0 0.0
    %1138 = vmatprep.subr.mxu0 0.0
    %1139 = vmatpush1.msra.mxu0 0.0
    %1140 = vmatprep.subr.mxu0 0.0
    %1141 = vmatpush1.msra.mxu0 0.0
    %1142 = vmatprep.subr.mxu0 0.0
    %1143 = vmatpush1.msra.mxu0 0.0
    %1144 = vmatprep.subr.mxu0 0.0
    %1145 = vmatpush1.msra.mxu0 0.0
    %1146 = vmatprep.subr.mxu0 0.0
    %1147 = vmatpush1.msra.mxu0 0.0
    %1148 = vmatprep.subr.mxu0 0.0
    %1149 = vmatpush1.msra.mxu0 0.0
    %1150 = vmatprep.subr.mxu0 0.0
    %1151 = vmatpush1.msra.mxu0 0.0
    %1152 = vmatprep.subr.mxu0 0.0
    %1153 = vmatpush1.msra.mxu0 0.0
    %1154 = vmatprep.subr.mxu0 0.0
    %1155 = vmatpush1.msra.mxu0 0.0
    %1156 = vmatprep.subr.mxu0 0.0
    %1157 = vmatpush1.msra.mxu0 0.0
    %1158 = vmatprep.subr.mxu0 0.0
    %1159 = vmatpush1.msra.mxu0 0.0
    %1160 = vmatprep.subr.mxu0 0.0
    %1161 = vmatpush1.msra.mxu0 0.0
    %1162 = vmatprep.subr.mxu0 0.0
    %1163 = vmatpush1.msra.mxu0 0.0
    %1164 = vmatprep.subr.mxu0 0.0
    %1165 = vmatpush1.msra.mxu0 0.0
    %1166 = vmatprep.subr.mxu0 0.0
    %1167 = vmatpush1.msra.mxu0 0.0
    %1168 = vmatprep.subr.mxu0 0.0
    %1169 = vmatpush1.msra.mxu0 0.0
    %1170 = vmatprep.subr.mxu0 0.0
    %1171 = vmatpush1.msra.mxu0 0.0
    %1172 = vmatprep.subr.mxu0 0.0
    %1173 = vmatpush1.msra.mxu0 0.0
    %1174 = vmatprep.subr.mxu0 0.0
    %1175 = vmatpush1.msra.mxu0 0.0
    %1176 = vmatprep.subr.mxu0 0.0
    %1177 = vmatpush1.msra.mxu0 0.0
    %1178 = vmatprep.subr.mxu0 0.0
    %1179 = vmatpush1.msra.mxu0 0.0
    %1180 = vmatprep.subr.mxu0 0.0
    %1181 = vmatpush1.msra.mxu0 0.0
    %1182 = vmatprep.mubr.f32.mxu0 0.0
    %1183 = vmatmul.mubr.f32.gmra.mrb[0].mxu0 %v500
    %v1184 = vpop.f32.mrb[0].mxu0
    %v1185 = vadd.f32 0.0, %v1184
    %v1186 = vpop.f32.mrb[0].mxu0
    %v1187 = vadd.f32 0.0, %v1186
    %1188 = vdwg.mxu0
    %v1193 = vcombine.low %v1114, %v1116
    %v1194 = vcombine.low %v1185, %v1187
    %s1197 = scalar_lea.vmem %s5, 16
    %1198 = vst [vmem:[%s1197] sm:$0x77] %v1193
    %1199 = vst [vmem:[%s1197 + $0x8] sm:$0x77] %v1194
    %s1200 = scalar_lea.vmem [#allocation7], 64
    %v1201 = vld [vmem:[%s1200] sm:$0xff]
    %v1202 = vld [vmem:[%s1200 + $0x8] sm:$0xff]
    %v1203 = vld [vmem:[%s1200 + $0x10] sm:$0xff]
    %v1204 = vld [vmem:[%s1200 + $0x18] sm:$0xff]
    %1205 = vmatprep.subr.mxu0 %v1202
    %1206 = vmatpush1.msra.mxu0 %v1201
    %1207 = vmatprep.subr.mxu0 0.0
    %1208 = vmatpush1.msra.mxu0 0.0
    %1209 = vmatprep.subr.mxu0 0.0
    %1210 = vmatpush1.msra.mxu0 0.0
    %1211 = vmatprep.subr.mxu0 0.0
    %1212 = vmatpush1.msra.mxu0 0.0
    %1213 = vmatprep.subr.mxu0 0.0
    %1214 = vmatpush1.msra.mxu0 0.0
    %1215 = vmatprep.subr.mxu0 0.0
    %1216 = vmatpush1.msra.mxu0 0.0
    %1217 = vmatprep.subr.mxu0 0.0
    %1218 = vmatpush1.msra.mxu0 0.0
    %1219 = vmatprep.subr.mxu0 0.0
    %1220 = vmatpush1.msra.mxu0 0.0
    %1221 = vmatprep.subr.mxu0 0.0
    %1222 = vmatpush1.msra.mxu0 0.0
    %1223 = vmatprep.subr.mxu0 0.0
    %1224 = vmatpush1.msra.mxu0 0.0
    %1225 = vmatprep.subr.mxu0 0.0
    %1226 = vmatpush1.msra.mxu0 0.0
    %1227 = vmatprep.subr.mxu0 0.0
    %1228 = vmatpush1.msra.mxu0 0.0
    %1229 = vmatprep.subr.mxu0 0.0
    %1230 = vmatpush1.msra.mxu0 0.0
    %1231 = vmatprep.subr.mxu0 0.0
    %1232 = vmatpush1.msra.mxu0 0.0
    %1233 = vmatprep.subr.mxu0 0.0
    %1234 = vmatpush1.msra.mxu0 0.0
    %1235 = vmatprep.subr.mxu0 0.0
    %1236 = vmatpush1.msra.mxu0 0.0
    %1237 = vmatprep.subr.mxu0 0.0
    %1238 = vmatpush1.msra.mxu0 0.0
    %1239 = vmatprep.subr.mxu0 0.0
    %1240 = vmatpush1.msra.mxu0 0.0
    %1241 = vmatprep.subr.mxu0 0.0
    %1242 = vmatpush1.msra.mxu0 0.0
    %1243 = vmatprep.subr.mxu0 0.0
    %1244 = vmatpush1.msra.mxu0 0.0
    %1245 = vmatprep.subr.mxu0 0.0
    %1246 = vmatpush1.msra.mxu0 0.0
    %1247 = vmatprep.subr.mxu0 0.0
    %1248 = vmatpush1.msra.mxu0 0.0
    %1249 = vmatprep.subr.mxu0 0.0
    %1250 = vmatpush1.msra.mxu0 0.0
    %1251 = vmatprep.subr.mxu0 0.0
    %1252 = vmatpush1.msra.mxu0 0.0
    %1253 = vmatprep.subr.mxu0 0.0
    %1254 = vmatpush1.msra.mxu0 0.0
    %1255 = vmatprep.subr.mxu0 0.0
    %1256 = vmatpush1.msra.mxu0 0.0
    %1257 = vmatprep.subr.mxu0 0.0
    %1258 = vmatpush1.msra.mxu0 0.0
    %1259 = vmatprep.subr.mxu0 0.0
    %1260 = vmatpush1.msra.mxu0 0.0
    %1261 = vmatprep.subr.mxu0 0.0
    %1262 = vmatpush1.msra.mxu0 0.0
    %1263 = vmatprep.subr.mxu0 0.0
    %1264 = vmatpush1.msra.mxu0 0.0
    %1265 = vmatprep.subr.mxu0 0.0
    %1266 = vmatpush1.msra.mxu0 0.0
    %1267 = vmatprep.subr.mxu0 0.0
    %1268 = vmatpush1.msra.mxu0 0.0
    %1269 = vmatprep.mubr.f32.mxu0 0.0
    %1270 = vmatmul.mubr.f32.gmra.mrb[0].mxu0 %v87
    %v1271 = vpop.f32.mrb[0].mxu0
    %v1272 = vadd.f32 0.0, %v1271
    %v1273 = vpop.f32.mrb[0].mxu0
    %v1274 = vadd.f32 0.0, %v1273
    %1275 = vmatprep.mubr.f32.mxu0 0.0
    %1276 = vmatmul.mubr.f32.gmra.mrb[0].mxu0 %v90
    %v1277 = vpop.f32.mrb[0].mxu0
    %v1278 = vadd.f32 0.0, %v1277
    %v1279 = vpop.f32.mrb[0].mxu0
    %v1280 = vadd.f32 0.0, %v1279
    %1281 = vmatprep.mubr.f32.mxu0 0.0
    %1282 = vmatmul.mubr.f32.gmra.mrb[0].mxu0 %v93
    %v1283 = vpop.f32.mrb[0].mxu0
    %v1284 = vadd.f32 0.0, %v1283
    %v1285 = vpop.f32.mrb[0].mxu0
    %v1286 = vadd.f32 0.0, %v1285
    %1287 = vmatprep.mubr.f32.mxu0 0.0
    %1288 = vmatmul.mubr.f32.gmra.mrb[0].mxu0 %v96
    %v1289 = vpop.f32.mrb[0].mxu0
    %v1290 = vadd.f32 0.0, %v1289
    %v1291 = vpop.f32.mrb[0].mxu0
    %v1292 = vadd.f32 0.0, %v1291
    %1293 = vdwg.mxu0
    %1294 = vmatprep.subr.mxu0 %v1204
    %1295 = vmatpush1.msra.mxu0 %v1203
    %1296 = vmatprep.subr.mxu0 0.0
    %1297 = vmatpush1.msra.mxu0 0.0
    %1298 = vmatprep.subr.mxu0 0.0
    %1299 = vmatpush1.msra.mxu0 0.0
    %1300 = vmatprep.subr.mxu0 0.0
    %1301 = vmatpush1.msra.mxu0 0.0
    %1302 = vmatprep.subr.mxu0 0.0
    %1303 = vmatpush1.msra.mxu0 0.0
    %1304 = vmatprep.subr.mxu0 0.0
    %1305 = vmatpush1.msra.mxu0 0.0
    %1306 = vmatprep.subr.mxu0 0.0
    %1307 = vmatpush1.msra.mxu0 0.0
    %1308 = vmatprep.subr.mxu0 0.0
    %1309 = vmatpush1.msra.mxu0 0.0
    %1310 = vmatprep.subr.mxu0 0.0
    %1311 = vmatpush1.msra.mxu0 0.0
    %1312 = vmatprep.subr.mxu0 0.0
    %1313 = vmatpush1.msra.mxu0 0.0
    %1314 = vmatprep.subr.mxu0 0.0
    %1315 = vmatpush1.msra.mxu0 0.0
    %1316 = vmatprep.subr.mxu0 0.0
    %1317 = vmatpush1.msra.mxu0 0.0
    %1318 = vmatprep.subr.mxu0 0.0
    %1319 = vmatpush1.msra.mxu0 0.0
    %1320 = vmatprep.subr.mxu0 0.0
    %1321 = vmatpush1.msra.mxu0 0.0
    %1322 = vmatprep.subr.mxu0 0.0
    %1323 = vmatpush1.msra.mxu0 0.0
    %1324 = vmatprep.subr.mxu0 0.0
    %1325 = vmatpush1.msra.mxu0 0.0
    %1326 = vmatprep.subr.mxu0 0.0
    %1327 = vmatpush1.msra.mxu0 0.0
    %1328 = vmatprep.subr.mxu0 0.0
    %1329 = vmatpush1.msra.mxu0 0.0
    %1330 = vmatprep.subr.mxu0 0.0
    %1331 = vmatpush1.msra.mxu0 0.0
    %1332 = vmatprep.subr.mxu0 0.0
    %1333 = vmatpush1.msra.mxu0 0.0
    %1334 = vmatprep.subr.mxu0 0.0
    %1335 = vmatpush1.msra.mxu0 0.0
    %1336 = vmatprep.subr.mxu0 0.0
    %1337 = vmatpush1.msra.mxu0 0.0
    %1338 = vmatprep.subr.mxu0 0.0
    %1339 = vmatpush1.msra.mxu0 0.0
    %1340 = vmatprep.subr.mxu0 0.0
    %1341 = vmatpush1.msra.mxu0 0.0
    %1342 = vmatprep.subr.mxu0 0.0
    %1343 = vmatpush1.msra.mxu0 0.0
    %1344 = vmatprep.subr.mxu0 0.0
    %1345 = vmatpush1.msra.mxu0 0.0
    %1346 = vmatprep.subr.mxu0 0.0
    %1347 = vmatpush1.msra.mxu0 0.0
    %1348 = vmatprep.subr.mxu0 0.0
    %1349 = vmatpush1.msra.mxu0 0.0
    %1350 = vmatprep.subr.mxu0 0.0
    %1351 = vmatpush1.msra.mxu0 0.0
    %1352 = vmatprep.subr.mxu0 0.0
    %1353 = vmatpush1.msra.mxu0 0.0
    %1354 = vmatprep.subr.mxu0 0.0
    %1355 = vmatpush1.msra.mxu0 0.0
    %1356 = vmatprep.subr.mxu0 0.0
    %1357 = vmatpush1.msra.mxu0 0.0
    %1358 = vmatprep.mubr.f32.mxu0 0.0
    %1359 = vmatmul.mubr.f32.gmra.mrb[0].mxu0 %v87
    %v1360 = vpop.f32.mrb[0].mxu0
    %v1361 = vadd.f32 0.0, %v1360
    %v1362 = vpop.f32.mrb[0].mxu0
    %v1363 = vadd.f32 0.0, %v1362
    %1364 = vmatprep.mubr.f32.mxu0 0.0
    %1365 = vmatmul.mubr.f32.gmra.mrb[0].mxu0 %v90
    %v1366 = vpop.f32.mrb[0].mxu0
    %v1367 = vadd.f32 0.0, %v1366
    %v1368 = vpop.f32.mrb[0].mxu0
    %v1369 = vadd.f32 0.0, %v1368
    %1370 = vmatprep.mubr.f32.mxu0 0.0
    %1371 = vmatmul.mubr.f32.gmra.mrb[0].mxu0 %v93
    %v1372 = vpop.f32.mrb[0].mxu0
    %v1373 = vadd.f32 0.0, %v1372
    %v1374 = vpop.f32.mrb[0].mxu0
    %v1375 = vadd.f32 0.0, %v1374
    %1376 = vmatprep.mubr.f32.mxu0 0.0
    %1377 = vmatmul.mubr.f32.gmra.mrb[0].mxu0 %v96
    %v1378 = vpop.f32.mrb[0].mxu0
    %v1379 = vadd.f32 0.0, %v1378
    %v1380 = vpop.f32.mrb[0].mxu0
    %v1381 = vadd.f32 0.0, %v1380
    %1382 = vdwg.mxu0
    %v1383 = vmax.f32 %v1272, 0.0
    %v1384 = vmax.f32 %v1274, 0.0
    %v1385 = vmax.f32 %v1361, 0.0
    %v1386 = vmax.f32 %v1363, 0.0
    %v1387 = vmax.f32 %v1278, 0.0
    %v1388 = vmax.f32 %v1280, 0.0
    %v1389 = vmax.f32 %v1367, 0.0
    %v1390 = vmax.f32 %v1369, 0.0
    %v1391 = vmax.f32 %v1284, 0.0
    %v1392 = vmax.f32 %v1286, 0.0
    %v1393 = vmax.f32 %v1373, 0.0
    %v1394 = vmax.f32 %v1375, 0.0
    %v1395 = vmax.f32 %v1290, 0.0
    %v1396 = vmax.f32 %v1292, 0.0
    %v1397 = vmax.f32 %v1379, 0.0
    %v1398 = vmax.f32 %v1381, 0.0
    %1399 = vmatprep.subr.mxu0 %v1384
    %1400 = vmatpush1.msra.mxu0 %v1383
    %1401 = vmatprep.subr.mxu0 %v1388
    %1402 = vmatpush1.msra.mxu0 %v1387
    %1403 = vmatprep.subr.mxu0 %v1392
    %1404 = vmatpush1.msra.mxu0 %v1391
    %1405 = vmatprep.subr.mxu0 %v1396
    %1406 = vmatpush1.msra.mxu0 %v1395
    %1407 = vmatprep.subr.mxu0 0.0
    %1408 = vmatpush1.msra.mxu0 0.0
    %1409 = vmatprep.subr.mxu0 0.0
    %1410 = vmatpush1.msra.mxu0 0.0
    %1411 = vmatprep.subr.mxu0 0.0
    %1412 = vmatpush1.msra.mxu0 0.0
    %1413 = vmatprep.subr.mxu0 0.0
    %1414 = vmatpush1.msra.mxu0 0.0
    %1415 = vmatprep.subr.mxu0 0.0
    %1416 = vmatpush1.msra.mxu0 0.0
    %1417 = vmatprep.subr.mxu0 0.0
    %1418 = vmatpush1.msra.mxu0 0.0
    %1419 = vmatprep.subr.mxu0 0.0
    %1420 = vmatpush1.msra.mxu0 0.0
    %1421 = vmatprep.subr.mxu0 0.0
    %1422 = vmatpush1.msra.mxu0 0.0
    %1423 = vmatprep.subr.mxu0 0.0
    %1424 = vmatpush1.msra.mxu0 0.0
    %1425 = vmatprep.subr.mxu0 0.0
    %1426 = vmatpush1.msra.mxu0 0.0
    %1427 = vmatprep.subr.mxu0 0.0
    %1428 = vmatpush1.msra.mxu0 0.0
    %1429 = vmatprep.subr.mxu0 0.0
    %1430 = vmatpush1.msra.mxu0 0.0
    %1431 = vmatprep.subr.mxu0 0.0
    %1432 = vmatpush1.msra.mxu0 0.0
    %1433 = vmatprep.subr.mxu0 0.0
    %1434 = vmatpush1.msra.mxu0 0.0
    %1435 = vmatprep.subr.mxu0 0.0
    %1436 = vmatpush1.msra.mxu0 0.0
    %1437 = vmatprep.subr.mxu0 0.0
    %1438 = vmatpush1.msra.mxu0 0.0
    %1439 = vmatprep.subr.mxu0 0.0
    %1440 = vmatpush1.msra.mxu0 0.0
    %1441 = vmatprep.subr.mxu0 0.0
    %1442 = vmatpush1.msra.mxu0 0.0
    %1443 = vmatprep.subr.mxu0 0.0
    %1444 = vmatpush1.msra.mxu0 0.0
    %1445 = vmatprep.subr.mxu0 0.0
    %1446 = vmatpush1.msra.mxu0 0.0
    %1447 = vmatprep.subr.mxu0 0.0
    %1448 = vmatpush1.msra.mxu0 0.0
    %1449 = vmatprep.subr.mxu0 0.0
    %1450 = vmatpush1.msra.mxu0 0.0
    %1451 = vmatprep.subr.mxu0 0.0
    %1452 = vmatpush1.msra.mxu0 0.0
    %1453 = vmatprep.subr.mxu0 0.0
    %1454 = vmatpush1.msra.mxu0 0.0
    %1455 = vmatprep.subr.mxu0 0.0
    %1456 = vmatpush1.msra.mxu0 0.0
    %1457 = vmatprep.subr.mxu0 0.0
    %1458 = vmatpush1.msra.mxu0 0.0
    %1459 = vmatprep.subr.mxu0 0.0
    %1460 = vmatpush1.msra.mxu0 0.0
    %1461 = vmatprep.subr.mxu0 0.0
    %1462 = vmatpush1.msra.mxu0 0.0
    %1463 = vmatprep.mubr.f32.mxu0 0.0
    %1464 = vmatmul.mubr.f32.gmra.mrb[0].mxu0 %v294
    %v1465 = vpop.f32.mrb[0].mxu0
    %v1466 = vadd.f32 0.0, %v1465
    %v1467 = vpop.f32.mrb[0].mxu0
    %v1468 = vadd.f32 0.0, %v1467
    %1469 = vmatprep.mubr.f32.mxu0 0.0
    %1470 = vmatmul.mubr.f32.gmra.mrb[0].mxu0 %v297
    %v1471 = vpop.f32.mrb[0].mxu0
    %v1472 = vadd.f32 0.0, %v1471
    %v1473 = vpop.f32.mrb[0].mxu0
    %v1474 = vadd.f32 0.0, %v1473
    %1475 = vmatprep.mubr.f32.mxu0 0.0
    %1476 = vmatmul.mubr.f32.gmra.mrb[0].mxu0 %v300
    %v1477 = vpop.f32.mrb[0].mxu0
    %v1478 = vadd.f32 0.0, %v1477
    %v1479 = vpop.f32.mrb[0].mxu0
    %v1480 = vadd.f32 0.0, %v1479
    %1481 = vmatprep.mubr.f32.mxu0 0.0
    %1482 = vmatmul.mubr.f32.gmra.mrb[0].mxu0 %v303
    %v1483 = vpop.f32.mrb[0].mxu0
    %v1484 = vadd.f32 0.0, %v1483
    %v1485 = vpop.f32.mrb[0].mxu0
    %v1486 = vadd.f32 0.0, %v1485
    %1487 = vdwg.mxu0
    %1488 = vmatprep.subr.mxu0 %v1386
    %1489 = vmatpush1.msra.mxu0 %v1385
    %1490 = vmatprep.subr.mxu0 %v1390
    %1491 = vmatpush1.msra.mxu0 %v1389
    %1492 = vmatprep.subr.mxu0 %v1394
    %1493 = vmatpush1.msra.mxu0 %v1393
    %1494 = vmatprep.subr.mxu0 %v1398
    %1495 = vmatpush1.msra.mxu0 %v1397
    %1496 = vmatprep.subr.mxu0 0.0
    %1497 = vmatpush1.msra.mxu0 0.0
    %1498 = vmatprep.subr.mxu0 0.0
    %1499 = vmatpush1.msra.mxu0 0.0
    %1500 = vmatprep.subr.mxu0 0.0
    %1501 = vmatpush1.msra.mxu0 0.0
    %1502 = vmatprep.subr.mxu0 0.0
    %1503 = vmatpush1.msra.mxu0 0.0
    %1504 = vmatprep.subr.mxu0 0.0
    %1505 = vmatpush1.msra.mxu0 0.0
    %1506 = vmatprep.subr.mxu0 0.0
    %1507 = vmatpush1.msra.mxu0 0.0
    %1508 = vmatprep.subr.mxu0 0.0
    %1509 = vmatpush1.msra.mxu0 0.0
    %1510 = vmatprep.subr.mxu0 0.0
    %1511 = vmatpush1.msra.mxu0 0.0
    %1512 = vmatprep.subr.mxu0 0.0
    %1513 = vmatpush1.msra.mxu0 0.0
    %1514 = vmatprep.subr.mxu0 0.0
    %1515 = vmatpush1.msra.mxu0 0.0
    %1516 = vmatprep.subr.mxu0 0.0
    %1517 = vmatpush1.msra.mxu0 0.0
    %1518 = vmatprep.subr.mxu0 0.0
    %1519 = vmatpush1.msra.mxu0 0.0
    %1520 = vmatprep.subr.mxu0 0.0
    %1521 = vmatpush1.msra.mxu0 0.0
    %1522 = vmatprep.subr.mxu0 0.0
    %1523 = vmatpush1.msra.mxu0 0.0
    %1524 = vmatprep.subr.mxu0 0.0
    %1525 = vmatpush1.msra.mxu0 0.0
    %1526 = vmatprep.subr.mxu0 0.0
    %1527 = vmatpush1.msra.mxu0 0.0
    %1528 = vmatprep.subr.mxu0 0.0
    %1529 = vmatpush1.msra.mxu0 0.0
    %1530 = vmatprep.subr.mxu0 0.0
    %1531 = vmatpush1.msra.mxu0 0.0
    %1532 = vmatprep.subr.mxu0 0.0
    %1533 = vmatpush1.msra.mxu0 0.0
    %1534 = vmatprep.subr.mxu0 0.0
    %1535 = vmatpush1.msra.mxu0 0.0
    %1536 = vmatprep.subr.mxu0 0.0
    %1537 = vmatpush1.msra.mxu0 0.0
    %1538 = vmatprep.subr.mxu0 0.0
    %1539 = vmatpush1.msra.mxu0 0.0
    %1540 = vmatprep.subr.mxu0 0.0
    %1541 = vmatpush1.msra.mxu0 0.0
    %1542 = vmatprep.subr.mxu0 0.0
    %1543 = vmatpush1.msra.mxu0 0.0
    %1544 = vmatprep.subr.mxu0 0.0
    %1545 = vmatpush1.msra.mxu0 0.0
    %1546 = vmatprep.subr.mxu0 0.0
    %1547 = vmatpush1.msra.mxu0 0.0
    %1548 = vmatprep.subr.mxu0 0.0
    %1549 = vmatpush1.msra.mxu0 0.0
    %1550 = vmatprep.subr.mxu0 0.0
    %1551 = vmatpush1.msra.mxu0 0.0
    %1552 = vmatprep.mubr.f32.mxu0 0.0
    %1553 = vmatmul.mubr.f32.gmra.mrb[0].mxu0 %v294
    %v1554 = vpop.f32.mrb[0].mxu0
    %v1555 = vadd.f32 0.0, %v1554
    %v1556 = vpop.f32.mrb[0].mxu0
    %v1557 = vadd.f32 0.0, %v1556
    %1558 = vmatprep.mubr.f32.mxu0 0.0
    %1559 = vmatmul.mubr.f32.gmra.mrb[0].mxu0 %v297
    %v1560 = vpop.f32.mrb[0].mxu0
    %v1561 = vadd.f32 0.0, %v1560
    %v1562 = vpop.f32.mrb[0].mxu0
    %v1563 = vadd.f32 0.0, %v1562
    %1564 = vmatprep.mubr.f32.mxu0 0.0
    %1565 = vmatmul.mubr.f32.gmra.mrb[0].mxu0 %v300
    %v1566 = vpop.f32.mrb[0].mxu0
    %v1567 = vadd.f32 0.0, %v1566
    %v1568 = vpop.f32.mrb[0].mxu0
    %v1569 = vadd.f32 0.0, %v1568
    %1570 = vmatprep.mubr.f32.mxu0 0.0
    %1571 = vmatmul.mubr.f32.gmra.mrb[0].mxu0 %v303
    %v1572 = vpop.f32.mrb[0].mxu0
    %v1573 = vadd.f32 0.0, %v1572
    %v1574 = vpop.f32.mrb[0].mxu0
    %v1575 = vadd.f32 0.0, %v1574
    %1576 = vdwg.mxu0
    %v1577 = vmax.f32 %v1466, 0.0
    %v1578 = vmax.f32 %v1468, 0.0
    %v1579 = vmax.f32 %v1555, 0.0
    %v1580 = vmax.f32 %v1557, 0.0
    %v1581 = vmax.f32 %v1472, 0.0
    %v1582 = vmax.f32 %v1474, 0.0
    %v1583 = vmax.f32 %v1561, 0.0
    %v1584 = vmax.f32 %v1563, 0.0
    %v1585 = vmax.f32 %v1478, 0.0
    %v1586 = vmax.f32 %v1480, 0.0
    %v1587 = vmax.f32 %v1567, 0.0
    %v1588 = vmax.f32 %v1569, 0.0
    %v1589 = vmax.f32 %v1484, 0.0
    %v1590 = vmax.f32 %v1486, 0.0
    %v1591 = vmax.f32 %v1573, 0.0
    %v1592 = vmax.f32 %v1575, 0.0
    %1593 = vmatprep.subr.mxu0 %v1578
    %1594 = vmatpush1.msra.mxu0 %v1577
    %1595 = vmatprep.subr.mxu0 %v1582
    %1596 = vmatpush1.msra.mxu0 %v1581
    %1597 = vmatprep.subr.mxu0 %v1586
    %1598 = vmatpush1.msra.mxu0 %v1585
    %1599 = vmatprep.subr.mxu0 %v1590
    %1600 = vmatpush1.msra.mxu0 %v1589
    %1601 = vmatprep.subr.mxu0 0.0
    %1602 = vmatpush1.msra.mxu0 0.0
    %1603 = vmatprep.subr.mxu0 0.0
    %1604 = vmatpush1.msra.mxu0 0.0
    %1605 = vmatprep.subr.mxu0 0.0
    %1606 = vmatpush1.msra.mxu0 0.0
    %1607 = vmatprep.subr.mxu0 0.0
    %1608 = vmatpush1.msra.mxu0 0.0
    %1609 = vmatprep.subr.mxu0 0.0
    %1610 = vmatpush1.msra.mxu0 0.0
    %1611 = vmatprep.subr.mxu0 0.0
    %1612 = vmatpush1.msra.mxu0 0.0
    %1613 = vmatprep.subr.mxu0 0.0
    %1614 = vmatpush1.msra.mxu0 0.0
    %1615 = vmatprep.subr.mxu0 0.0
    %1616 = vmatpush1.msra.mxu0 0.0
    %1617 = vmatprep.subr.mxu0 0.0
    %1618 = vmatpush1.msra.mxu0 0.0
    %1619 = vmatprep.subr.mxu0 0.0
    %1620 = vmatpush1.msra.mxu0 0.0
    %1621 = vmatprep.subr.mxu0 0.0
    %1622 = vmatpush1.msra.mxu0 0.0
    %1623 = vmatprep.subr.mxu0 0.0
    %1624 = vmatpush1.msra.mxu0 0.0
    %1625 = vmatprep.subr.mxu0 0.0
    %1626 = vmatpush1.msra.mxu0 0.0
    %1627 = vmatprep.subr.mxu0 0.0
    %1628 = vmatpush1.msra.mxu0 0.0
    %1629 = vmatprep.subr.mxu0 0.0
    %1630 = vmatpush1.msra.mxu0 0.0
    %1631 = vmatprep.subr.mxu0 0.0
    %1632 = vmatpush1.msra.mxu0 0.0
    %1633 = vmatprep.subr.mxu0 0.0
    %1634 = vmatpush1.msra.mxu0 0.0
    %1635 = vmatprep.subr.mxu0 0.0
    %1636 = vmatpush1.msra.mxu0 0.0
    %1637 = vmatprep.subr.mxu0 0.0
    %1638 = vmatpush1.msra.mxu0 0.0
    %1639 = vmatprep.subr.mxu0 0.0
    %1640 = vmatpush1.msra.mxu0 0.0
    %1641 = vmatprep.subr.mxu0 0.0
    %1642 = vmatpush1.msra.mxu0 0.0
    %1643 = vmatprep.subr.mxu0 0.0
    %1644 = vmatpush1.msra.mxu0 0.0
    %1645 = vmatprep.subr.mxu0 0.0
    %1646 = vmatpush1.msra.mxu0 0.0
    %1647 = vmatprep.subr.mxu0 0.0
    %1648 = vmatpush1.msra.mxu0 0.0
    %1649 = vmatprep.subr.mxu0 0.0
    %1650 = vmatpush1.msra.mxu0 0.0
    %1651 = vmatprep.subr.mxu0 0.0
    %1652 = vmatpush1.msra.mxu0 0.0
    %1653 = vmatprep.subr.mxu0 0.0
    %1654 = vmatpush1.msra.mxu0 0.0
    %1655 = vmatprep.subr.mxu0 0.0
    %1656 = vmatpush1.msra.mxu0 0.0
    %1657 = vmatprep.mubr.f32.mxu0 0.0
    %1658 = vmatmul.mubr.f32.gmra.mrb[0].mxu0 %v500
    %v1659 = vpop.f32.mrb[0].mxu0
    %v1660 = vadd.f32 0.0, %v1659
    %v1661 = vpop.f32.mrb[0].mxu0
    %v1662 = vadd.f32 0.0, %v1661
    %1663 = vdwg.mxu0
    %1664 = vmatprep.subr.mxu0 %v1580
    %1665 = vmatpush1.msra.mxu0 %v1579
    %1666 = vmatprep.subr.mxu0 %v1584
    %1667 = vmatpush1.msra.mxu0 %v1583
    %1668 = vmatprep.subr.mxu0 %v1588
    %1669 = vmatpush1.msra.mxu0 %v1587
    %1670 = vmatprep.subr.mxu0 %v1592
    %1671 = vmatpush1.msra.mxu0 %v1591
    %1672 = vmatprep.subr.mxu0 0.0
    %1673 = vmatpush1.msra.mxu0 0.0
    %1674 = vmatprep.subr.mxu0 0.0
    %1675 = vmatpush1.msra.mxu0 0.0
    %1676 = vmatprep.subr.mxu0 0.0
    %1677 = vmatpush1.msra.mxu0 0.0
    %1678 = vmatprep.subr.mxu0 0.0
    %1679 = vmatpush1.msra.mxu0 0.0
    %1680 = vmatprep.subr.mxu0 0.0
    %1681 = vmatpush1.msra.mxu0 0.0
    %1682 = vmatprep.subr.mxu0 0.0
    %1683 = vmatpush1.msra.mxu0 0.0
    %1684 = vmatprep.subr.mxu0 0.0
    %1685 = vmatpush1.msra.mxu0 0.0
    %1686 = vmatprep.subr.mxu0 0.0
    %1687 = vmatpush1.msra.mxu0 0.0
    %1688 = vmatprep.subr.mxu0 0.0
    %1689 = vmatpush1.msra.mxu0 0.0
    %1690 = vmatprep.subr.mxu0 0.0
    %1691 = vmatpush1.msra.mxu0 0.0
    %1692 = vmatprep.subr.mxu0 0.0
    %1693 = vmatpush1.msra.mxu0 0.0
    %1694 = vmatprep.subr.mxu0 0.0
    %1695 = vmatpush1.msra.mxu0 0.0
    %1696 = vmatprep.subr.mxu0 0.0
    %1697 = vmatpush1.msra.mxu0 0.0
    %1698 = vmatprep.subr.mxu0 0.0
    %1699 = vmatpush1.msra.mxu0 0.0
    %1700 = vmatprep.subr.mxu0 0.0
    %1701 = vmatpush1.msra.mxu0 0.0
    %1702 = vmatprep.subr.mxu0 0.0
    %1703 = vmatpush1.msra.mxu0 0.0
    %1704 = vmatprep.subr.mxu0 0.0
    %1705 = vmatpush1.msra.mxu0 0.0
    %1706 = vmatprep.subr.mxu0 0.0
    %1707 = vmatpush1.msra.mxu0 0.0
    %1708 = vmatprep.subr.mxu0 0.0
    %1709 = vmatpush1.msra.mxu0 0.0
    %1710 = vmatprep.subr.mxu0 0.0
    %1711 = vmatpush1.msra.mxu0 0.0
    %1712 = vmatprep.subr.mxu0 0.0
    %1713 = vmatpush1.msra.mxu0 0.0
    %1714 = vmatprep.subr.mxu0 0.0
    %1715 = vmatpush1.msra.mxu0 0.0
    %1716 = vmatprep.subr.mxu0 0.0
    %1717 = vmatpush1.msra.mxu0 0.0
    %1718 = vmatprep.subr.mxu0 0.0
    %1719 = vmatpush1.msra.mxu0 0.0
    %1720 = vmatprep.subr.mxu0 0.0
    %1721 = vmatpush1.msra.mxu0 0.0
    %1722 = vmatprep.subr.mxu0 0.0
    %1723 = vmatpush1.msra.mxu0 0.0
    %1724 = vmatprep.subr.mxu0 0.0
    %1725 = vmatpush1.msra.mxu0 0.0
    %1726 = vmatprep.subr.mxu0 0.0
    %1727 = vmatpush1.msra.mxu0 0.0
    %1728 = vmatprep.mubr.f32.mxu0 0.0
    %1729 = vmatmul.mubr.f32.gmra.mrb[0].mxu0 %v500
    %v1730 = vpop.f32.mrb[0].mxu0
    %v1731 = vadd.f32 0.0, %v1730
    %v1732 = vpop.f32.mrb[0].mxu0
    %v1733 = vadd.f32 0.0, %v1732
    %1734 = vdwg.mxu0
    %v1739 = vcombine.low %v1660, %v1662
    %v1740 = vcombine.low %v1731, %v1733
    %s1743 = scalar_lea.vmem %s5, 32
    %1744 = vst [vmem:[%s1743] sm:$0x77] %v1739
    %1745 = vst [vmem:[%s1743 + $0x8] sm:$0x77] %v1740
    %s1746 = scalar_lea.vmem [#allocation7], 96
    %v1747 = vld [vmem:[%s1746] sm:$0xff]
    %v1748 = vld [vmem:[%s1746 + $0x8] sm:$0xff]
    %v1749 = vld [vmem:[%s1746 + $0x10] sm:$0xff]
    %v1750 = vld [vmem:[%s1746 + $0x18] sm:$0xff]
    %1751 = vmatprep.subr.mxu0 %v1748
    %1752 = vmatpush1.msra.mxu0 %v1747
    %1753 = vmatprep.subr.mxu0 0.0
    %1754 = vmatpush1.msra.mxu0 0.0
    %1755 = vmatprep.subr.mxu0 0.0
    %1756 = vmatpush1.msra.mxu0 0.0
    %1757 = vmatprep.subr.mxu0 0.0
    %1758 = vmatpush1.msra.mxu0 0.0
    %1759 = vmatprep.subr.mxu0 0.0
    %1760 = vmatpush1.msra.mxu0 0.0
    %1761 = vmatprep.subr.mxu0 0.0
    %1762 = vmatpush1.msra.mxu0 0.0
    %1763 = vmatprep.subr.mxu0 0.0
    %1764 = vmatpush1.msra.mxu0 0.0
    %1765 = vmatprep.subr.mxu0 0.0
    %1766 = vmatpush1.msra.mxu0 0.0
    %1767 = vmatprep.subr.mxu0 0.0
    %1768 = vmatpush1.msra.mxu0 0.0
    %1769 = vmatprep.subr.mxu0 0.0
    %1770 = vmatpush1.msra.mxu0 0.0
    %1771 = vmatprep.subr.mxu0 0.0
    %1772 = vmatpush1.msra.mxu0 0.0
    %1773 = vmatprep.subr.mxu0 0.0
    %1774 = vmatpush1.msra.mxu0 0.0
    %1775 = vmatprep.subr.mxu0 0.0
    %1776 = vmatpush1.msra.mxu0 0.0
    %1777 = vmatprep.subr.mxu0 0.0
    %1778 = vmatpush1.msra.mxu0 0.0
    %1779 = vmatprep.subr.mxu0 0.0
    %1780 = vmatpush1.msra.mxu0 0.0
    %1781 = vmatprep.subr.mxu0 0.0
    %1782 = vmatpush1.msra.mxu0 0.0
    %1783 = vmatprep.subr.mxu0 0.0
    %1784 = vmatpush1.msra.mxu0 0.0
    %1785 = vmatprep.subr.mxu0 0.0
    %1786 = vmatpush1.msra.mxu0 0.0
    %1787 = vmatprep.subr.mxu0 0.0
    %1788 = vmatpush1.msra.mxu0 0.0
    %1789 = vmatprep.subr.mxu0 0.0
    %1790 = vmatpush1.msra.mxu0 0.0
    %1791 = vmatprep.subr.mxu0 0.0
    %1792 = vmatpush1.msra.mxu0 0.0
    %1793 = vmatprep.subr.mxu0 0.0
    %1794 = vmatpush1.msra.mxu0 0.0
    %1795 = vmatprep.subr.mxu0 0.0
    %1796 = vmatpush1.msra.mxu0 0.0
    %1797 = vmatprep.subr.mxu0 0.0
    %1798 = vmatpush1.msra.mxu0 0.0
    %1799 = vmatprep.subr.mxu0 0.0
    %1800 = vmatpush1.msra.mxu0 0.0
    %1801 = vmatprep.subr.mxu0 0.0
    %1802 = vmatpush1.msra.mxu0 0.0
    %1803 = vmatprep.subr.mxu0 0.0
    %1804 = vmatpush1.msra.mxu0 0.0
    %1805 = vmatprep.subr.mxu0 0.0
    %1806 = vmatpush1.msra.mxu0 0.0
    %1807 = vmatprep.subr.mxu0 0.0
    %1808 = vmatpush1.msra.mxu0 0.0
    %1809 = vmatprep.subr.mxu0 0.0
    %1810 = vmatpush1.msra.mxu0 0.0
    %1811 = vmatprep.subr.mxu0 0.0
    %1812 = vmatpush1.msra.mxu0 0.0
    %1813 = vmatprep.subr.mxu0 0.0
    %1814 = vmatpush1.msra.mxu0 0.0
    %1815 = vmatprep.mubr.f32.mxu0 0.0
    %1816 = vmatmul.mubr.f32.gmra.mrb[0].mxu0 %v87
    %v1817 = vpop.f32.mrb[0].mxu0
    %v1818 = vadd.f32 0.0, %v1817
    %v1819 = vpop.f32.mrb[0].mxu0
    %v1820 = vadd.f32 0.0, %v1819
    %1821 = vmatprep.mubr.f32.mxu0 0.0
    %1822 = vmatmul.mubr.f32.gmra.mrb[0].mxu0 %v90
    %v1823 = vpop.f32.mrb[0].mxu0
    %v1824 = vadd.f32 0.0, %v1823
    %v1825 = vpop.f32.mrb[0].mxu0
    %v1826 = vadd.f32 0.0, %v1825
    %1827 = vmatprep.mubr.f32.mxu0 0.0
    %1828 = vmatmul.mubr.f32.gmra.mrb[0].mxu0 %v93
    %v1829 = vpop.f32.mrb[0].mxu0
    %v1830 = vadd.f32 0.0, %v1829
    %v1831 = vpop.f32.mrb[0].mxu0
    %v1832 = vadd.f32 0.0, %v1831
    %1833 = vmatprep.mubr.f32.mxu0 0.0
    %1834 = vmatmul.mubr.f32.gmra.mrb[0].mxu0 %v96
    %v1835 = vpop.f32.mrb[0].mxu0
    %v1836 = vadd.f32 0.0, %v1835
    %v1837 = vpop.f32.mrb[0].mxu0
    %v1838 = vadd.f32 0.0, %v1837
    %1839 = vdwg.mxu0
    %1840 = vmatprep.subr.mxu0 %v1750
    %1841 = vmatpush1.msra.mxu0 %v1749
    %1842 = vmatprep.subr.mxu0 0.0
    %1843 = vmatpush1.msra.mxu0 0.0
    %1844 = vmatprep.subr.mxu0 0.0
    %1845 = vmatpush1.msra.mxu0 0.0
    %1846 = vmatprep.subr.mxu0 0.0
    %1847 = vmatpush1.msra.mxu0 0.0
    %1848 = vmatprep.subr.mxu0 0.0
    %1849 = vmatpush1.msra.mxu0 0.0
    %1850 = vmatprep.subr.mxu0 0.0
    %1851 = vmatpush1.msra.mxu0 0.0
    %1852 = vmatprep.subr.mxu0 0.0
    %1853 = vmatpush1.msra.mxu0 0.0
    %1854 = vmatprep.subr.mxu0 0.0
    %1855 = vmatpush1.msra.mxu0 0.0
    %1856 = vmatprep.subr.mxu0 0.0
    %1857 = vmatpush1.msra.mxu0 0.0
    %1858 = vmatprep.subr.mxu0 0.0
    %1859 = vmatpush1.msra.mxu0 0.0
    %1860 = vmatprep.subr.mxu0 0.0
    %1861 = vmatpush1.msra.mxu0 0.0
    %1862 = vmatprep.subr.mxu0 0.0
    %1863 = vmatpush1.msra.mxu0 0.0
    %1864 = vmatprep.subr.mxu0 0.0
    %1865 = vmatpush1.msra.mxu0 0.0
    %1866 = vmatprep.subr.mxu0 0.0
    %1867 = vmatpush1.msra.mxu0 0.0
    %1868 = vmatprep.subr.mxu0 0.0
    %1869 = vmatpush1.msra.mxu0 0.0
    %1870 = vmatprep.subr.mxu0 0.0
    %1871 = vmatpush1.msra.mxu0 0.0
    %1872 = vmatprep.subr.mxu0 0.0
    %1873 = vmatpush1.msra.mxu0 0.0
    %1874 = vmatprep.subr.mxu0 0.0
    %1875 = vmatpush1.msra.mxu0 0.0
    %1876 = vmatprep.subr.mxu0 0.0
    %1877 = vmatpush1.msra.mxu0 0.0
    %1878 = vmatprep.subr.mxu0 0.0
    %1879 = vmatpush1.msra.mxu0 0.0
    %1880 = vmatprep.subr.mxu0 0.0
    %1881 = vmatpush1.msra.mxu0 0.0
    %1882 = vmatprep.subr.mxu0 0.0
    %1883 = vmatpush1.msra.mxu0 0.0
    %1884 = vmatprep.subr.mxu0 0.0
    %1885 = vmatpush1.msra.mxu0 0.0
    %1886 = vmatprep.subr.mxu0 0.0
    %1887 = vmatpush1.msra.mxu0 0.0
    %1888 = vmatprep.subr.mxu0 0.0
    %1889 = vmatpush1.msra.mxu0 0.0
    %1890 = vmatprep.subr.mxu0 0.0
    %1891 = vmatpush1.msra.mxu0 0.0
    %1892 = vmatprep.subr.mxu0 0.0
    %1893 = vmatpush1.msra.mxu0 0.0
    %1894 = vmatprep.subr.mxu0 0.0
    %1895 = vmatpush1.msra.mxu0 0.0
    %1896 = vmatprep.subr.mxu0 0.0
    %1897 = vmatpush1.msra.mxu0 0.0
    %1898 = vmatprep.subr.mxu0 0.0
    %1899 = vmatpush1.msra.mxu0 0.0
    %1900 = vmatprep.subr.mxu0 0.0
    %1901 = vmatpush1.msra.mxu0 0.0
    %1902 = vmatprep.subr.mxu0 0.0
    %1903 = vmatpush1.msra.mxu0 0.0
    %1904 = vmatprep.mubr.f32.mxu0 0.0
    %1905 = vmatmul.mubr.f32.gmra.mrb[0].mxu0 %v87
    %v1906 = vpop.f32.mrb[0].mxu0
    %v1907 = vadd.f32 0.0, %v1906
    %v1908 = vpop.f32.mrb[0].mxu0
    %v1909 = vadd.f32 0.0, %v1908
    %1910 = vmatprep.mubr.f32.mxu0 0.0
    %1911 = vmatmul.mubr.f32.gmra.mrb[0].mxu0 %v90
    %v1912 = vpop.f32.mrb[0].mxu0
    %v1913 = vadd.f32 0.0, %v1912
    %v1914 = vpop.f32.mrb[0].mxu0
    %v1915 = vadd.f32 0.0, %v1914
    %1916 = vmatprep.mubr.f32.mxu0 0.0
    %1917 = vmatmul.mubr.f32.gmra.mrb[0].mxu0 %v93
    %v1918 = vpop.f32.mrb[0].mxu0
    %v1919 = vadd.f32 0.0, %v1918
    %v1920 = vpop.f32.mrb[0].mxu0
    %v1921 = vadd.f32 0.0, %v1920
    %1922 = vmatprep.mubr.f32.mxu0 0.0
    %1923 = vmatmul.mubr.f32.gmra.mrb[0].mxu0 %v96
    %v1924 = vpop.f32.mrb[0].mxu0
    %v1925 = vadd.f32 0.0, %v1924
    %v1926 = vpop.f32.mrb[0].mxu0
    %v1927 = vadd.f32 0.0, %v1926
    %1928 = vdwg.mxu0
    %v1929 = vmax.f32 %v1818, 0.0
    %v1930 = vmax.f32 %v1820, 0.0
    %v1931 = vmax.f32 %v1907, 0.0
    %v1932 = vmax.f32 %v1909, 0.0
    %v1933 = vmax.f32 %v1824, 0.0
    %v1934 = vmax.f32 %v1826, 0.0
    %v1935 = vmax.f32 %v1913, 0.0
    %v1936 = vmax.f32 %v1915, 0.0
    %v1937 = vmax.f32 %v1830, 0.0
    %v1938 = vmax.f32 %v1832, 0.0
    %v1939 = vmax.f32 %v1919, 0.0
    %v1940 = vmax.f32 %v1921, 0.0
    %v1941 = vmax.f32 %v1836, 0.0
    %v1942 = vmax.f32 %v1838, 0.0
    %v1943 = vmax.f32 %v1925, 0.0
    %v1944 = vmax.f32 %v1927, 0.0
    %1945 = vmatprep.subr.mxu0 %v1930
    %1946 = vmatpush1.msra.mxu0 %v1929
    %1947 = vmatprep.subr.mxu0 %v1934
    %1948 = vmatpush1.msra.mxu0 %v1933
    %1949 = vmatprep.subr.mxu0 %v1938
    %1950 = vmatpush1.msra.mxu0 %v1937
    %1951 = vmatprep.subr.mxu0 %v1942
    %1952 = vmatpush1.msra.mxu0 %v1941
    %1953 = vmatprep.subr.mxu0 0.0
    %1954 = vmatpush1.msra.mxu0 0.0
    %1955 = vmatprep.subr.mxu0 0.0
    %1956 = vmatpush1.msra.mxu0 0.0
    %1957 = vmatprep.subr.mxu0 0.0
    %1958 = vmatpush1.msra.mxu0 0.0
    %1959 = vmatprep.subr.mxu0 0.0
    %1960 = vmatpush1.msra.mxu0 0.0
    %1961 = vmatprep.subr.mxu0 0.0
    %1962 = vmatpush1.msra.mxu0 0.0
    %1963 = vmatprep.subr.mxu0 0.0
    %1964 = vmatpush1.msra.mxu0 0.0
    %1965 = vmatprep.subr.mxu0 0.0
    %1966 = vmatpush1.msra.mxu0 0.0
    %1967 = vmatprep.subr.mxu0 0.0
    %1968 = vmatpush1.msra.mxu0 0.0
    %1969 = vmatprep.subr.mxu0 0.0
    %1970 = vmatpush1.msra.mxu0 0.0
    %1971 = vmatprep.subr.mxu0 0.0
    %1972 = vmatpush1.msra.mxu0 0.0
    %1973 = vmatprep.subr.mxu0 0.0
    %1974 = vmatpush1.msra.mxu0 0.0
    %1975 = vmatprep.subr.mxu0 0.0
    %1976 = vmatpush1.msra.mxu0 0.0
    %1977 = vmatprep.subr.mxu0 0.0
    %1978 = vmatpush1.msra.mxu0 0.0
    %1979 = vmatprep.subr.mxu0 0.0
    %1980 = vmatpush1.msra.mxu0 0.0
    %1981 = vmatprep.subr.mxu0 0.0
    %1982 = vmatpush1.msra.mxu0 0.0
    %1983 = vmatprep.subr.mxu0 0.0
    %1984 = vmatpush1.msra.mxu0 0.0
    %1985 = vmatprep.subr.mxu0 0.0
    %1986 = vmatpush1.msra.mxu0 0.0
    %1987 = vmatprep.subr.mxu0 0.0
    %1988 = vmatpush1.msra.mxu0 0.0
    %1989 = vmatprep.subr.mxu0 0.0
    %1990 = vmatpush1.msra.mxu0 0.0
    %1991 = vmatprep.subr.mxu0 0.0
    %1992 = vmatpush1.msra.mxu0 0.0
    %1993 = vmatprep.subr.mxu0 0.0
    %1994 = vmatpush1.msra.mxu0 0.0
    %1995 = vmatprep.subr.mxu0 0.0
    %1996 = vmatpush1.msra.mxu0 0.0
    %1997 = vmatprep.subr.mxu0 0.0
    %1998 = vmatpush1.msra.mxu0 0.0
    %1999 = vmatprep.subr.mxu0 0.0
    %2000 = vmatpush1.msra.mxu0 0.0
    %2001 = vmatprep.subr.mxu0 0.0
    %2002 = vmatpush1.msra.mxu0 0.0
    %2003 = vmatprep.subr.mxu0 0.0
    %2004 = vmatpush1.msra.mxu0 0.0
    %2005 = vmatprep.subr.mxu0 0.0
    %2006 = vmatpush1.msra.mxu0 0.0
    %2007 = vmatprep.subr.mxu0 0.0
    %2008 = vmatpush1.msra.mxu0 0.0
    %2009 = vmatprep.mubr.f32.mxu0 0.0
    %2010 = vmatmul.mubr.f32.gmra.mrb[0].mxu0 %v294
    %v2011 = vpop.f32.mrb[0].mxu0
    %v2012 = vadd.f32 0.0, %v2011
    %v2013 = vpop.f32.mrb[0].mxu0
    %v2014 = vadd.f32 0.0, %v2013
    %2015 = vmatprep.mubr.f32.mxu0 0.0
    %2016 = vmatmul.mubr.f32.gmra.mrb[0].mxu0 %v297
    %v2017 = vpop.f32.mrb[0].mxu0
    %v2018 = vadd.f32 0.0, %v2017
    %v2019 = vpop.f32.mrb[0].mxu0
    %v2020 = vadd.f32 0.0, %v2019
    %2021 = vmatprep.mubr.f32.mxu0 0.0
    %2022 = vmatmul.mubr.f32.gmra.mrb[0].mxu0 %v300
    %v2023 = vpop.f32.mrb[0].mxu0
    %v2024 = vadd.f32 0.0, %v2023
    %v2025 = vpop.f32.mrb[0].mxu0
    %v2026 = vadd.f32 0.0, %v2025
    %2027 = vmatprep.mubr.f32.mxu0 0.0
    %2028 = vmatmul.mubr.f32.gmra.mrb[0].mxu0 %v303
    %v2029 = vpop.f32.mrb[0].mxu0
    %v2030 = vadd.f32 0.0, %v2029
    %v2031 = vpop.f32.mrb[0].mxu0
    %v2032 = vadd.f32 0.0, %v2031
    %2033 = vdwg.mxu0
    %2034 = vmatprep.subr.mxu0 %v1932
    %2035 = vmatpush1.msra.mxu0 %v1931
    %2036 = vmatprep.subr.mxu0 %v1936
    %2037 = vmatpush1.msra.mxu0 %v1935
    %2038 = vmatprep.subr.mxu0 %v1940
    %2039 = vmatpush1.msra.mxu0 %v1939
    %2040 = vmatprep.subr.mxu0 %v1944
    %2041 = vmatpush1.msra.mxu0 %v1943
    %2042 = vmatprep.subr.mxu0 0.0
    %2043 = vmatpush1.msra.mxu0 0.0
    %2044 = vmatprep.subr.mxu0 0.0
    %2045 = vmatpush1.msra.mxu0 0.0
    %2046 = vmatprep.subr.mxu0 0.0
    %2047 = vmatpush1.msra.mxu0 0.0
    %2048 = vmatprep.subr.mxu0 0.0
    %2049 = vmatpush1.msra.mxu0 0.0
    %2050 = vmatprep.subr.mxu0 0.0
    %2051 = vmatpush1.msra.mxu0 0.0
    %2052 = vmatprep.subr.mxu0 0.0
    %2053 = vmatpush1.msra.mxu0 0.0
    %2054 = vmatprep.subr.mxu0 0.0
    %2055 = vmatpush1.msra.mxu0 0.0
    %2056 = vmatprep.subr.mxu0 0.0
    %2057 = vmatpush1.msra.mxu0 0.0
    %2058 = vmatprep.subr.mxu0 0.0
    %2059 = vmatpush1.msra.mxu0 0.0
    %2060 = vmatprep.subr.mxu0 0.0
    %2061 = vmatpush1.msra.mxu0 0.0
    %2062 = vmatprep.subr.mxu0 0.0
    %2063 = vmatpush1.msra.mxu0 0.0
    %2064 = vmatprep.subr.mxu0 0.0
    %2065 = vmatpush1.msra.mxu0 0.0
    %2066 = vmatprep.subr.mxu0 0.0
    %2067 = vmatpush1.msra.mxu0 0.0
    %2068 = vmatprep.subr.mxu0 0.0
    %2069 = vmatpush1.msra.mxu0 0.0
    %2070 = vmatprep.subr.mxu0 0.0
    %2071 = vmatpush1.msra.mxu0 0.0
    %2072 = vmatprep.subr.mxu0 0.0
    %2073 = vmatpush1.msra.mxu0 0.0
    %2074 = vmatprep.subr.mxu0 0.0
    %2075 = vmatpush1.msra.mxu0 0.0
    %2076 = vmatprep.subr.mxu0 0.0
    %2077 = vmatpush1.msra.mxu0 0.0
    %2078 = vmatprep.subr.mxu0 0.0
    %2079 = vmatpush1.msra.mxu0 0.0
    %2080 = vmatprep.subr.mxu0 0.0
    %2081 = vmatpush1.msra.mxu0 0.0
    %2082 = vmatprep.subr.mxu0 0.0
    %2083 = vmatpush1.msra.mxu0 0.0
    %2084 = vmatprep.subr.mxu0 0.0
    %2085 = vmatpush1.msra.mxu0 0.0
    %2086 = vmatprep.subr.mxu0 0.0
    %2087 = vmatpush1.msra.mxu0 0.0
    %2088 = vmatprep.subr.mxu0 0.0
    %2089 = vmatpush1.msra.mxu0 0.0
    %2090 = vmatprep.subr.mxu0 0.0
    %2091 = vmatpush1.msra.mxu0 0.0
    %2092 = vmatprep.subr.mxu0 0.0
    %2093 = vmatpush1.msra.mxu0 0.0
    %2094 = vmatprep.subr.mxu0 0.0
    %2095 = vmatpush1.msra.mxu0 0.0
    %2096 = vmatprep.subr.mxu0 0.0
    %2097 = vmatpush1.msra.mxu0 0.0
    %2098 = vmatprep.mubr.f32.mxu0 0.0
    %2099 = vmatmul.mubr.f32.gmra.mrb[0].mxu0 %v294
    %v2100 = vpop.f32.mrb[0].mxu0
    %v2101 = vadd.f32 0.0, %v2100
    %v2102 = vpop.f32.mrb[0].mxu0
    %v2103 = vadd.f32 0.0, %v2102
    %2104 = vmatprep.mubr.f32.mxu0 0.0
    %2105 = vmatmul.mubr.f32.gmra.mrb[0].mxu0 %v297
    %v2106 = vpop.f32.mrb[0].mxu0
    %v2107 = vadd.f32 0.0, %v2106
    %v2108 = vpop.f32.mrb[0].mxu0
    %v2109 = vadd.f32 0.0, %v2108
    %2110 = vmatprep.mubr.f32.mxu0 0.0
    %2111 = vmatmul.mubr.f32.gmra.mrb[0].mxu0 %v300
    %v2112 = vpop.f32.mrb[0].mxu0
    %v2113 = vadd.f32 0.0, %v2112
    %v2114 = vpop.f32.mrb[0].mxu0
    %v2115 = vadd.f32 0.0, %v2114
    %2116 = vmatprep.mubr.f32.mxu0 0.0
    %2117 = vmatmul.mubr.f32.gmra.mrb[0].mxu0 %v303
    %v2118 = vpop.f32.mrb[0].mxu0
    %v2119 = vadd.f32 0.0, %v2118
    %v2120 = vpop.f32.mrb[0].mxu0
    %v2121 = vadd.f32 0.0, %v2120
    %2122 = vdwg.mxu0
    %v2123 = vmax.f32 %v2012, 0.0
    %v2124 = vmax.f32 %v2014, 0.0
    %v2125 = vmax.f32 %v2101, 0.0
    %v2126 = vmax.f32 %v2103, 0.0
    %v2127 = vmax.f32 %v2018, 0.0
    %v2128 = vmax.f32 %v2020, 0.0
    %v2129 = vmax.f32 %v2107, 0.0
    %v2130 = vmax.f32 %v2109, 0.0
    %v2131 = vmax.f32 %v2024, 0.0
    %v2132 = vmax.f32 %v2026, 0.0
    %v2133 = vmax.f32 %v2113, 0.0
    %v2134 = vmax.f32 %v2115, 0.0
    %v2135 = vmax.f32 %v2030, 0.0
    %v2136 = vmax.f32 %v2032, 0.0
    %v2137 = vmax.f32 %v2119, 0.0
    %v2138 = vmax.f32 %v2121, 0.0
    %2139 = vmatprep.subr.mxu0 %v2124
    %2140 = vmatpush1.msra.mxu0 %v2123
    %2141 = vmatprep.subr.mxu0 %v2128
    %2142 = vmatpush1.msra.mxu0 %v2127
    %2143 = vmatprep.subr.mxu0 %v2132
    %2144 = vmatpush1.msra.mxu0 %v2131
    %2145 = vmatprep.subr.mxu0 %v2136
    %2146 = vmatpush1.msra.mxu0 %v2135
    %2147 = vmatprep.subr.mxu0 0.0
    %2148 = vmatpush1.msra.mxu0 0.0
    %2149 = vmatprep.subr.mxu0 0.0
    %2150 = vmatpush1.msra.mxu0 0.0
    %2151 = vmatprep.subr.mxu0 0.0
    %2152 = vmatpush1.msra.mxu0 0.0
    %2153 = vmatprep.subr.mxu0 0.0
    %2154 = vmatpush1.msra.mxu0 0.0
    %2155 = vmatprep.subr.mxu0 0.0
    %2156 = vmatpush1.msra.mxu0 0.0
    %2157 = vmatprep.subr.mxu0 0.0
    %2158 = vmatpush1.msra.mxu0 0.0
    %2159 = vmatprep.subr.mxu0 0.0
    %2160 = vmatpush1.msra.mxu0 0.0
    %2161 = vmatprep.subr.mxu0 0.0
    %2162 = vmatpush1.msra.mxu0 0.0
    %2163 = vmatprep.subr.mxu0 0.0
    %2164 = vmatpush1.msra.mxu0 0.0
    %2165 = vmatprep.subr.mxu0 0.0
    %2166 = vmatpush1.msra.mxu0 0.0
    %2167 = vmatprep.subr.mxu0 0.0
    %2168 = vmatpush1.msra.mxu0 0.0
    %2169 = vmatprep.subr.mxu0 0.0
    %2170 = vmatpush1.msra.mxu0 0.0
    %2171 = vmatprep.subr.mxu0 0.0
    %2172 = vmatpush1.msra.mxu0 0.0
    %2173 = vmatprep.subr.mxu0 0.0
    %2174 = vmatpush1.msra.mxu0 0.0
    %2175 = vmatprep.subr.mxu0 0.0
    %2176 = vmatpush1.msra.mxu0 0.0
    %2177 = vmatprep.subr.mxu0 0.0
    %2178 = vmatpush1.msra.mxu0 0.0
    %2179 = vmatprep.subr.mxu0 0.0
    %2180 = vmatpush1.msra.mxu0 0.0
    %2181 = vmatprep.subr.mxu0 0.0
    %2182 = vmatpush1.msra.mxu0 0.0
    %2183 = vmatprep.subr.mxu0 0.0
    %2184 = vmatpush1.msra.mxu0 0.0
    %2185 = vmatprep.subr.mxu0 0.0
    %2186 = vmatpush1.msra.mxu0 0.0
    %2187 = vmatprep.subr.mxu0 0.0
    %2188 = vmatpush1.msra.mxu0 0.0
    %2189 = vmatprep.subr.mxu0 0.0
    %2190 = vmatpush1.msra.mxu0 0.0
    %2191 = vmatprep.subr.mxu0 0.0
    %2192 = vmatpush1.msra.mxu0 0.0
    %2193 = vmatprep.subr.mxu0 0.0
    %2194 = vmatpush1.msra.mxu0 0.0
    %2195 = vmatprep.subr.mxu0 0.0
    %2196 = vmatpush1.msra.mxu0 0.0
    %2197 = vmatprep.subr.mxu0 0.0
    %2198 = vmatpush1.msra.mxu0 0.0
    %2199 = vmatprep.subr.mxu0 0.0
    %2200 = vmatpush1.msra.mxu0 0.0
    %2201 = vmatprep.subr.mxu0 0.0
    %2202 = vmatpush1.msra.mxu0 0.0
    %2203 = vmatprep.mubr.f32.mxu0 0.0
    %2204 = vmatmul.mubr.f32.gmra.mrb[0].mxu0 %v500
    %v2205 = vpop.f32.mrb[0].mxu0
    %v2206 = vadd.f32 0.0, %v2205
    %v2207 = vpop.f32.mrb[0].mxu0
    %v2208 = vadd.f32 0.0, %v2207
    %2209 = vdwg.mxu0
    %2210 = vmatprep.subr.mxu0 %v2126
    %2211 = vmatpush1.msra.mxu0 %v2125
    %2212 = vmatprep.subr.mxu0 %v2130
    %2213 = vmatpush1.msra.mxu0 %v2129
    %2214 = vmatprep.subr.mxu0 %v2134
    %2215 = vmatpush1.msra.mxu0 %v2133
    %2216 = vmatprep.subr.mxu0 %v2138
    %2217 = vmatpush1.msra.mxu0 %v2137
    %2218 = vmatprep.subr.mxu0 0.0
    %2219 = vmatpush1.msra.mxu0 0.0
    %2220 = vmatprep.subr.mxu0 0.0
    %2221 = vmatpush1.msra.mxu0 0.0
    %2222 = vmatprep.subr.mxu0 0.0
    %2223 = vmatpush1.msra.mxu0 0.0
    %2224 = vmatprep.subr.mxu0 0.0
    %2225 = vmatpush1.msra.mxu0 0.0
    %2226 = vmatprep.subr.mxu0 0.0
    %2227 = vmatpush1.msra.mxu0 0.0
    %2228 = vmatprep.subr.mxu0 0.0
    %2229 = vmatpush1.msra.mxu0 0.0
    %2230 = vmatprep.subr.mxu0 0.0
    %2231 = vmatpush1.msra.mxu0 0.0
    %2232 = vmatprep.subr.mxu0 0.0
    %2233 = vmatpush1.msra.mxu0 0.0
    %2234 = vmatprep.subr.mxu0 0.0
    %2235 = vmatpush1.msra.mxu0 0.0
    %2236 = vmatprep.subr.mxu0 0.0
    %2237 = vmatpush1.msra.mxu0 0.0
    %2238 = vmatprep.subr.mxu0 0.0
    %2239 = vmatpush1.msra.mxu0 0.0
    %2240 = vmatprep.subr.mxu0 0.0
    %2241 = vmatpush1.msra.mxu0 0.0
    %2242 = vmatprep.subr.mxu0 0.0
    %2243 = vmatpush1.msra.mxu0 0.0
    %2244 = vmatprep.subr.mxu0 0.0
    %2245 = vmatpush1.msra.mxu0 0.0
    %2246 = vmatprep.subr.mxu0 0.0
    %2247 = vmatpush1.msra.mxu0 0.0
    %2248 = vmatprep.subr.mxu0 0.0
    %2249 = vmatpush1.msra.mxu0 0.0
    %2250 = vmatprep.subr.mxu0 0.0
    %2251 = vmatpush1.msra.mxu0 0.0
    %2252 = vmatprep.subr.mxu0 0.0
    %2253 = vmatpush1.msra.mxu0 0.0
    %2254 = vmatprep.subr.mxu0 0.0
    %2255 = vmatpush1.msra.mxu0 0.0
    %2256 = vmatprep.subr.mxu0 0.0
    %2257 = vmatpush1.msra.mxu0 0.0
    %2258 = vmatprep.subr.mxu0 0.0
    %2259 = vmatpush1.msra.mxu0 0.0
    %2260 = vmatprep.subr.mxu0 0.0
    %2261 = vmatpush1.msra.mxu0 0.0
    %2262 = vmatprep.subr.mxu0 0.0
    %2263 = vmatpush1.msra.mxu0 0.0
    %2264 = vmatprep.subr.mxu0 0.0
    %2265 = vmatpush1.msra.mxu0 0.0
    %2266 = vmatprep.subr.mxu0 0.0
    %2267 = vmatpush1.msra.mxu0 0.0
    %2268 = vmatprep.subr.mxu0 0.0
    %2269 = vmatpush1.msra.mxu0 0.0
    %2270 = vmatprep.subr.mxu0 0.0
    %2271 = vmatpush1.msra.mxu0 0.0
    %2272 = vmatprep.subr.mxu0 0.0
    %2273 = vmatpush1.msra.mxu0 0.0
    %2274 = vmatprep.mubr.f32.mxu0 0.0
    %2275 = vmatmul.mubr.f32.gmra.mrb[0].mxu0 %v500
    %v2276 = vpop.f32.mrb[0].mxu0
    %v2277 = vadd.f32 0.0, %v2276
    %v2278 = vpop.f32.mrb[0].mxu0
    %v2279 = vadd.f32 0.0, %v2278
    %2280 = vdwg.mxu0
    %v2285 = vcombine.low %v2206, %v2208
    %v2286 = vcombine.low %v2277, %v2279
    %s2289 = scalar_lea.vmem %s5, 48
    %2290 = vst [vmem:[%s2289] sm:$0x77] %v2285
    %2291 = vst [vmem:[%s2289 + $0x8] sm:$0x77] %v2286
    // Predicated region
    $region18: #{dqn_forward.2} parent=1 // pred_check
      _
    $region19: #{dqn_forward.2} parent=1 // pred_check_branch
      %2293 = sbr.rel (0) target = $region21
    $region20: #{dqn_forward.2} parent=1 // pred_region
      _
    $region21: #{dqn_forward.2} parent=1 // pred_fallthru
      _
    // Predicated region
    $region22: #{dqn_forward.2} parent=1 // pred_check
      _
    $region23: #{dqn_forward.2} parent=1 // pred_check_branch
      %2295 = sbr.rel (0) target = $region25
    $region24: #{dqn_forward.2} parent=1 // pred_region
      _
    $region25: #{dqn_forward.2} parent=1 // pred_fallthru
      _

</llo_original>
